<compile_context>
chip_gen: v5e
topology: v5e:2x2
jax: 0.10.0
libtpu: 0.0.40
codegen_flags: <defaults>
</compile_context>

<pallas_src>
import jax
import jax.numpy as jnp
import numpy as np
from jax import lax
from jax.experimental import pallas as pl
from jax.experimental.pallas import tpu as pltpu


def _encoder_kernel(x2_ref,       # (T*Bp, 2D)  bf16, [x[t] | x[T-1-t]] time-major
                    wx_ref,       # (2D, 8H)    bf16, block-structured input proj
                    bx_ref,       # (1, 8H)     f32,  combined biases (b_ih + b_hh)
                    whh_ref,      # (2H, 8H)    bf16, block-diagonal recurrent weight
                    whead_ref,    # (2H, 2Z)    bf16, [W_mu.T | W_sig.T]
                    bhead_ref,    # (1, 2Z)     f32
                    mu_ref,       # (Bp, Z)     f32
                    lv_ref,       # (Bp, Z)     f32
                    gx_ref):      # (T*Bp, 8H)  f32 scratch: precomputed gate preacts
    TB = x2_ref.shape[0]
    Bp = mu_ref.shape[0]
    T = TB // Bp
    H2 = whh_ref.shape[0]         # 2H
    H6 = 3 * H2                   # 6H
    Z = mu_ref.shape[1]

    # ---- hoisted input projection: ONE big MXU matmul, biases folded in ----
    # Each (Bp, 8H) row-slab t already holds fwd gates from x[t] and bwd gates
    # from x[T-1-t], so the recurrence below only touches one slab per step.
    gx_ref[...] = (
        jnp.dot(x2_ref[...], wx_ref[...], preferred_element_type=jnp.float32)
        + bx_ref[...]
    )

    whh = whh_ref[...]            # keep recurrent weight resident (bf16)

    h = jnp.zeros((Bp, H2), jnp.float32)   # [h_fwd | h_bwd]
    c = jnp.zeros((Bp, H2), jnp.float32)   # [c_fwd | c_bwd]

    # Fully unrolled recurrence (T static); every slice below is static and
    # sublane/lane aligned (Bp multiple of 8, H2 multiple of 128).
    for t in range(T):
        gates = gx_ref[pl.ds(t * Bp, Bp), :] + jnp.dot(
            h.astype(whh.dtype), whh, preferred_element_type=jnp.float32)

        s = jax.nn.sigmoid(gates[:, :H6])   # [i_f,i_b, f_f,f_b, o_f,o_b]
        g = jnp.tanh(gates[:, H6:])         # [g_f, g_b]
        i_g = s[:, 0:H2]
        f_g = s[:, H2:2 * H2]
        o_g = s[:, 2 * H2:3 * H2]

        c = f_g * c + i_g * g
        h = o_g * jnp.tanh(c)

    # h == concat(final fwd hidden, final bwd hidden) == torch.cat((h[-2], h[-1]), 1)
    head = (jnp.dot(h.astype(whead_ref.dtype), whead_ref[...],
                    preferred_element_type=jnp.float32)
            + bhead_ref[...])
    mu_ref[...] = head[:, :Z]
    lv_ref[...] = jnp.log(head[:, Z:] + 1.0)


def _prep_params(params, D, H):
    """Permute/fuse PyTorch LSTM + head weights into the kernel layout."""
    def gsplit(a):  # last dim 4H in PyTorch order [i, f, g, o]
        return {"i": a[..., 0:H], "f": a[..., H:2 * H],
                "g": a[..., 2 * H:3 * H], "o": a[..., 3 * H:4 * H]}

    wx_f = gsplit(params["w_ih_f"].T)                       # (D, H) per gate
    wx_b = gsplit(params["w_ih_b"].T)
    wh_f = gsplit(params["w_hh_f"].T)                       # (H, H) per gate
    wh_b = gsplit(params["w_hh_b"].T)
    b_f = gsplit((params["b_ih_f"] + params["b_hh_f"])[None, :])
    b_b = gsplit((params["b_ih_b"] + params["b_hh_b"])[None, :])

    order = ("i", "f", "o", "g")   # combined columns: [i_f,i_b,f_f,f_b,o_f,o_b,g_f,g_b]

    # Input projection over the prearranged [x[t] | x[T-1-t]] input: fwd gate
    # columns read only the first D rows, bwd gate columns only the last D.
    zD = jnp.zeros((D, H), jnp.float32)
    wx_cols = []
    for k in order:
        wx_cols.append(jnp.concatenate([wx_f[k], zD], axis=0))   # driven by x[t]
        wx_cols.append(jnp.concatenate([zD, wx_b[k]], axis=0))   # driven by x[T-1-t]
    wx = jnp.concatenate(wx_cols, axis=1)                        # (2D, 8H)

    bx = jnp.concatenate([b[k] for k in order for b in (b_f, b_b)], axis=1)  # (1, 8H)

    zH = jnp.zeros((H, H), jnp.float32)
    whh_cols = []
    for k in order:
        whh_cols.append(jnp.concatenate([wh_f[k], zH], axis=0))  # driven by h_fwd
        whh_cols.append(jnp.concatenate([zH, wh_b[k]], axis=0))  # driven by h_bwd
    whh = jnp.concatenate(whh_cols, axis=1)                      # (2H, 8H)

    w_head = jnp.concatenate([params["w_mu"].T, params["w_sig"].T], axis=1)  # (2H, 2Z)
    b_head = jnp.concatenate([params["b_mu"], params["b_sig"]])[None, :]     # (1, 2Z)

    bf16 = jnp.bfloat16
    return (wx.astype(bf16), bx.astype(jnp.float32), whh.astype(bf16),
            w_head.astype(bf16), b_head.astype(jnp.float32))


def encoder_forward(x, params):
    """x: (B, T, D) batch-first, like the PyTorch module. Returns (mu, log_var)."""
    B, T, D = x.shape
    H = params["w_hh_f"].shape[1]
    Z = params["w_mu"].shape[0]
    Bp = ((B + 7) // 8) * 8                      # pad batch to the f32 sublane tile

    wx, bx, whh, w_head, b_head = _prep_params(params, D, H)

    # Zero-pad batch, time-major flatten, and prearrange per-step input as
    # [x[t] | x[T-1-t]] so the kernel's recurrence touches exactly one
    # contiguous, sublane-aligned gate slab per step. x is tiny (width D) so
    # this reshuffle costs nothing next to the gate/weight traffic.
    x_p = jnp.zeros((Bp, T, D), jnp.float32).at[:B].set(x.astype(jnp.float32))
    x_fwd = jnp.transpose(x_p, (1, 0, 2))                 # (T, Bp, D) time-major
    x_bwd = x_fwd[::-1]                                   # x_bwd[t] = x[T-1-t]
    x2 = jnp.concatenate([x_fwd, x_bwd], axis=-1)         # (T, Bp, 2D)
    x2 = x2.reshape(T * Bp, 2 * D).astype(jnp.bfloat16)

    vmem = pl.BlockSpec(memory_space=pltpu.MemorySpace.VMEM)
    mu, logvar = pl.pallas_call(
        _encoder_kernel,
        out_shape=(jax.ShapeDtypeStruct((Bp, Z), jnp.float32),
                   jax.ShapeDtypeStruct((Bp, Z), jnp.float32)),
        in_specs=[vmem] * 6,
        out_specs=(vmem, vmem),
        scratch_shapes=[pltpu.VMEM((T * Bp, 8 * H), jnp.float32)],
        compiler_params=pltpu.CompilerParams(vmem_limit_bytes=32 * 1024 * 1024),
    )(x2, wx, bx, whh, w_head, b_head)
    return mu[:B], logvar[:B]


def init_params(key, input_dim, hidden_dim, z_dim):
    ks = jax.random.split(key, 12)
    u = lambda k, shape: jax.random.uniform(k, shape, jnp.float32, -0.1, 0.1)
    H4 = 4 * hidden_dim
    return {
        # forward direction LSTM (PyTorch convention: (4H, D), (4H, H), (4H,))
        "w_ih_f": u(ks[0], (H4, input_dim)),
        "w_hh_f": u(ks[1], (H4, hidden_dim)),
        "b_ih_f": u(ks[2], (H4,)),
        "b_hh_f": u(ks[3], (H4,)),
        # backward direction LSTM
        "w_ih_b": u(ks[4], (H4, input_dim)),
        "w_hh_b": u(ks[5], (H4, hidden_dim)),
        "b_ih_b": u(ks[6], (H4,)),
        "b_hh_b": u(ks[7], (H4,)),
        # fc_mu / fc_sigma: (Z, 2H), (Z,)
        "w_mu": u(ks[8], (z_dim, 2 * hidden_dim)),
        "b_mu": u(ks[9], (z_dim,)),
        "w_sig": u(ks[10], (z_dim, 2 * hidden_dim)),
        "b_sig": u(ks[11], (z_dim,)),
    }


def _encoder_ref(x, params):
    """Pure-JAX f32 reference mirroring the PyTorch module."""
    B, T, _ = x.shape
    H = params["w_hh_f"].shape[1]

    def cell(xt, h, c, wih, whh, b):
        gates = xt @ wih.T + h @ whh.T + b
        i = jax.nn.sigmoid(gates[:, 0:H])
        f = jax.nn.sigmoid(gates[:, H:2 * H])
        g = jnp.tanh(gates[:, 2 * H:3 * H])
        o = jax.nn.sigmoid(gates[:, 3 * H:4 * H])
        c = f * c + i * g
        return o * jnp.tanh(c), c

    h_f = c_f = jnp.zeros((B, H), jnp.float32)
    h_b = c_b = jnp.zeros((B, H), jnp.float32)
    bf = params["b_ih_f"] + params["b_hh_f"]
    bb = params["b_ih_b"] + params["b_hh_b"]
    for t in range(T):
        h_f, c_f = cell(x[:, t], h_f, c_f, params["w_ih_f"], params["w_hh_f"], bf)
        h_b, c_b = cell(x[:, T - 1 - t], h_b, c_b,
                        params["w_ih_b"], params["w_hh_b"], bb)
    h = jnp.concatenate([h_f, h_b], axis=1)
    mu = h @ params["w_mu"].T + params["b_mu"]
    sig = h @ params["w_sig"].T + params["b_sig"]
    return mu, jnp.log(sig + 1.0)


if __name__ == "__main__":
    # Small shapes consistent with the module's forward (batch, seq, input_dim);
    # hidden chosen so 2H == 128 lanes (vreg-aligned slices).
    B, T, D, H, Z = 2, 8, 4, 64, 32

    key = jax.random.PRNGKey(0)
    k_x, k_p = jax.random.split(key)
    x = jax.random.normal(k_x, (B, T, D), jnp.float32)
    params = init_params(k_p, D, H, Z)

    mu, log_var = encoder_forward(x, params)
    jax.block_until_ready((mu, log_var))
    assert mu.shape == (B, Z) and log_var.shape == (B, Z)

    mu_ref, lv_ref = _encoder_ref(x, params)
    assert np.allclose(np.asarray(mu), np.asarray(mu_ref), atol=5e-2, rtol=5e-2)
    assert np.allclose(np.asarray(log_var), np.asarray(lv_ref), atol=5e-2, rtol=5e-2)

    print("KERNEL_OK")
</pallas_src>

<mosaic_0001>
module attributes {stable_mosaic.version = 11 : i64} {
  func.func @_encoder_kernel(%arg0: memref<64x8xbf16, #tpu.memory_space<vmem>>, %arg1: memref<8x512xbf16, #tpu.memory_space<vmem>>, %arg2: memref<1x512xf32, #tpu.memory_space<vmem>>, %arg3: memref<128x512xbf16, #tpu.memory_space<vmem>>, %arg4: memref<128x64xbf16, #tpu.memory_space<vmem>>, %arg5: memref<1x64xf32, #tpu.memory_space<vmem>>, %arg6: memref<8x32xf32, #tpu.memory_space<vmem>>, %arg7: memref<8x32xf32, #tpu.memory_space<vmem>>, %arg8: memref<64x512xf32, #tpu.memory_space<vmem>>) attributes {dimension_semantics = [], scalar_prefetch = 0 : i64, scratch_operands = 1 : i64, tpu.core_type = #tpu.core_type<tc>} {
    %c0 = arith.constant 0 : index
    %c0_0 = arith.constant 0 : index
    %0 = vector.load %arg0[%c0, %c0_0] : memref<64x8xbf16, #tpu.memory_space<vmem>>, vector<64x8xbf16>
    %c0_1 = arith.constant 0 : index
    %c0_2 = arith.constant 0 : index
    %1 = vector.load %arg1[%c0_1, %c0_2] : memref<8x512xbf16, #tpu.memory_space<vmem>>, vector<8x512xbf16>
    %cst = arith.constant dense<0.000000e+00> : vector<64x512xf32>
    %2 = tpu.matmul %0, %1, %cst {dimension_numbers = #tpu.dot_dimension_numbers<[1], [0], [0], [1], [0, 0, 1, 1], [], []>} : vector<64x8xbf16>, vector<8x512xbf16>, vector<64x512xf32> -> vector<64x512xf32>
    %c0_3 = arith.constant 0 : index
    %c0_4 = arith.constant 0 : index
    %3 = vector.load %arg2[%c0_3, %c0_4] : memref<1x512xf32, #tpu.memory_space<vmem>>, vector<1x512xf32>
    %4 = vector.broadcast %3 : vector<1x512xf32> to vector<64x512xf32>
    %5 = arith.addf %2, %4 : vector<64x512xf32>
    %c0_5 = arith.constant 0 : index
    %c0_6 = arith.constant 0 : index
    %6 = vector.load %arg8[%c0_5, %c0_6] : memref<64x512xf32, #tpu.memory_space<vmem>>, vector<64x512xf32>
    tpu.vector_store %arg8[%c0_5, %c0_6], %5 {strides = array<i32>} : memref<64x512xf32, #tpu.memory_space<vmem>>, vector<64x512xf32>,
    %c0_7 = arith.constant 0 : index
    %c0_8 = arith.constant 0 : index
    %7 = vector.load %arg3[%c0_7, %c0_8] : memref<128x512xbf16, #tpu.memory_space<vmem>>, vector<128x512xbf16>
    %cst_9 = arith.constant 0.000000e+00 : f32
    %8 = vector.broadcast %cst_9 : f32 to vector<8x128xf32>
    %cst_10 = arith.constant 0.000000e+00 : f32
    %9 = vector.broadcast %cst_10 : f32 to vector<8x128xf32>
    %c0_11 = arith.constant 0 : index
    %c0_12 = arith.constant 0 : index
    %10 = vector.load %arg8[%c0_11, %c0_12] : memref<64x512xf32, #tpu.memory_space<vmem>>, vector<8x512xf32>
    %11 = arith.truncf %8 : vector<8x128xf32> to vector<8x128xbf16>
    %cst_13 = arith.constant dense<0.000000e+00> : vector<8x512xf32>
    %12 = tpu.matmul %11, %7, %cst_13 {dimension_numbers = #tpu.dot_dimension_numbers<[1], [0], [0], [1], [0, 0, 1, 1], [], []>} : vector<8x128xbf16>, vector<128x512xbf16>, vector<8x512xf32> -> vector<8x512xf32>
    %13 = arith.addf %10, %12 : vector<8x512xf32>
    %14 = vector.extract_strided_slice %13 {offsets = [0, 0], sizes = [8, 384], strides = [1, 1]} : vector<8x512xf32> to vector<8x384xf32>
    %15 = arith.negf %14 : vector<8x384xf32>
    %16 = math.exp %15 : vector<8x384xf32>
    %cst_14 = arith.constant 1.000000e+00 : f32
    %17 = vector.broadcast %cst_14 : f32 to vector<8x384xf32>
    %18 = arith.addf %17, %16 : vector<8x384xf32>
    %19 = arith.divf %17, %18 : vector<8x384xf32>
    %20 = vector.extract_strided_slice %13 {offsets = [0, 384], sizes = [8, 128], strides = [1, 1]} : vector<8x512xf32> to vector<8x128xf32>
    %21 = math.tanh %20 : vector<8x128xf32>
    %22 = vector.extract_strided_slice %19 {offsets = [0, 0], sizes = [8, 128], strides = [1, 1]} : vector<8x384xf32> to vector<8x128xf32>
    %23 = vector.extract_strided_slice %19 {offsets = [0, 128], sizes = [8, 128], strides = [1, 1]} : vector<8x384xf32> to vector<8x128xf32>
    %24 = vector.extract_strided_slice %19 {offsets = [0, 256], sizes = [8, 128], strides = [1, 1]} : vector<8x384xf32> to vector<8x128xf32>
    %25 = arith.mulf %23, %9 : vector<8x128xf32>
    %26 = arith.mulf %22, %21 : vector<8x128xf32>
    %27 = arith.addf %25, %26 : vector<8x128xf32>
    %28 = math.tanh %27 : vector<8x128xf32>
    %29 = arith.mulf %24, %28 : vector<8x128xf32>
    %c8 = arith.constant 8 : index
    %c0_15 = arith.constant 0 : index
    %30 = vector.load %arg8[%c8, %c0_15] : memref<64x512xf32, #tpu.memory_space<vmem>>, vector<8x512xf32>
    %31 = arith.truncf %29 : vector<8x128xf32> to vector<8x128xbf16>
    %cst_16 = arith.constant dense<0.000000e+00> : vector<8x512xf32>
    %32 = tpu.matmul %31, %7, %cst_16 {dimension_numbers = #tpu.dot_dimension_numbers<[1], [0], [0], [1], [0, 0, 1, 1], [], []>} : vector<8x128xbf16>, vector<128x512xbf16>, vector<8x512xf32> -> vector<8x512xf32>
    %33 = arith.addf %30, %32 : vector<8x512xf32>
    %34 = vector.extract_strided_slice %33 {offsets = [0, 0], sizes = [8, 384], strides = [1, 1]} : vector<8x512xf32> to vector<8x384xf32>
    %35 = arith.negf %34 : vector<8x384xf32>
    %36 = math.exp %35 : vector<8x384xf32>
    %cst_17 = arith.constant 1.000000e+00 : f32
    %37 = vector.broadcast %cst_17 : f32 to vector<8x384xf32>
    %38 = arith.addf %37, %36 : vector<8x384xf32>
    %39 = arith.divf %37, %38 : vector<8x384xf32>
    %40 = vector.extract_strided_slice %33 {offsets = [0, 384], sizes = [8, 128], strides = [1, 1]} : vector<8x512xf32> to vector<8x128xf32>
    %41 = math.tanh %40 : vector<8x128xf32>
    %42 = vector.extract_strided_slice %39 {offsets = [0, 0], sizes = [8, 128], strides = [1, 1]} : vector<8x384xf32> to vector<8x128xf32>
    %43 = vector.extract_strided_slice %39 {offsets = [0, 128], sizes = [8, 128], strides = [1, 1]} : vector<8x384xf32> to vector<8x128xf32>
    %44 = vector.extract_strided_slice %39 {offsets = [0, 256], sizes = [8, 128], strides = [1, 1]} : vector<8x384xf32> to vector<8x128xf32>
    %45 = arith.mulf %43, %27 : vector<8x128xf32>
    %46 = arith.mulf %42, %41 : vector<8x128xf32>
    %47 = arith.addf %45, %46 : vector<8x128xf32>
    %48 = math.tanh %47 : vector<8x128xf32>
    %49 = arith.mulf %44, %48 : vector<8x128xf32>
    %c16 = arith.constant 16 : index
    %c0_18 = arith.constant 0 : index
    %50 = vector.load %arg8[%c16, %c0_18] : memref<64x512xf32, #tpu.memory_space<vmem>>, vector<8x512xf32>
    %51 = arith.truncf %49 : vector<8x128xf32> to vector<8x128xbf16>
    %cst_19 = arith.constant dense<0.000000e+00> : vector<8x512xf32>
    %52 = tpu.matmul %51, %7, %cst_19 {dimension_numbers = #tpu.dot_dimension_numbers<[1], [0], [0], [1], [0, 0, 1, 1], [], []>} : vector<8x128xbf16>, vector<128x512xbf16>, vector<8x512xf32> -> vector<8x512xf32>
    %53 = arith.addf %50, %52 : vector<8x512xf32>
    %54 = vector.extract_strided_slice %53 {offsets = [0, 0], sizes = [8, 384], strides = [1, 1]} : vector<8x512xf32> to vector<8x384xf32>
    %55 = arith.negf %54 : vector<8x384xf32>
    %56 = math.exp %55 : vector<8x384xf32>
    %cst_20 = arith.constant 1.000000e+00 : f32
    %57 = vector.broadcast %cst_20 : f32 to vector<8x384xf32>
    %58 = arith.addf %57, %56 : vector<8x384xf32>
    %59 = arith.divf %57, %58 : vector<8x384xf32>
    %60 = vector.extract_strided_slice %53 {offsets = [0, 384], sizes = [8, 128], strides = [1, 1]} : vector<8x512xf32> to vector<8x128xf32>
    %61 = math.tanh %60 : vector<8x128xf32>
    %62 = vector.extract_strided_slice %59 {offsets = [0, 0], sizes = [8, 128], strides = [1, 1]} : vector<8x384xf32> to vector<8x128xf32>
    %63 = vector.extract_strided_slice %59 {offsets = [0, 128], sizes = [8, 128], strides = [1, 1]} : vector<8x384xf32> to vector<8x128xf32>
    %64 = vector.extract_strided_slice %59 {offsets = [0, 256], sizes = [8, 128], strides = [1, 1]} : vector<8x384xf32> to vector<8x128xf32>
    %65 = arith.mulf %63, %47 : vector<8x128xf32>
    %66 = arith.mulf %62, %61 : vector<8x128xf32>
    %67 = arith.addf %65, %66 : vector<8x128xf32>
    %68 = math.tanh %67 : vector<8x128xf32>
    %69 = arith.mulf %64, %68 : vector<8x128xf32>
    %c24 = arith.constant 24 : index
    %c0_21 = arith.constant 0 : index
    %70 = vector.load %arg8[%c24, %c0_21] : memref<64x512xf32, #tpu.memory_space<vmem>>, vector<8x512xf32>
    %71 = arith.truncf %69 : vector<8x128xf32> to vector<8x128xbf16>
    %cst_22 = arith.constant dense<0.000000e+00> : vector<8x512xf32>
    %72 = tpu.matmul %71, %7, %cst_22 {dimension_numbers = #tpu.dot_dimension_numbers<[1], [0], [0], [1], [0, 0, 1, 1], [], []>} : vector<8x128xbf16>, vector<128x512xbf16>, vector<8x512xf32> -> vector<8x512xf32>
    %73 = arith.addf %70, %72 : vector<8x512xf32>
    %74 = vector.extract_strided_slice %73 {offsets = [0, 0], sizes = [8, 384], strides = [1, 1]} : vector<8x512xf32> to vector<8x384xf32>
    %75 = arith.negf %74 : vector<8x384xf32>
    %76 = math.exp %75 : vector<8x384xf32>
    %cst_23 = arith.constant 1.000000e+00 : f32
    %77 = vector.broadcast %cst_23 : f32 to vector<8x384xf32>
    %78 = arith.addf %77, %76 : vector<8x384xf32>
    %79 = arith.divf %77, %78 : vector<8x384xf32>
    %80 = vector.extract_strided_slice %73 {offsets = [0, 384], sizes = [8, 128], strides = [1, 1]} : vector<8x512xf32> to vector<8x128xf32>
    %81 = math.tanh %80 : vector<8x128xf32>
    %82 = vector.extract_strided_slice %79 {offsets = [0, 0], sizes = [8, 128], strides = [1, 1]} : vector<8x384xf32> to vector<8x128xf32>
    %83 = vector.extract_strided_slice %79 {offsets = [0, 128], sizes = [8, 128], strides = [1, 1]} : vector<8x384xf32> to vector<8x128xf32>
    %84 = vector.extract_strided_slice %79 {offsets = [0, 256], sizes = [8, 128], strides = [1, 1]} : vector<8x384xf32> to vector<8x128xf32>
    %85 = arith.mulf %83, %67 : vector<8x128xf32>
    %86 = arith.mulf %82, %81 : vector<8x128xf32>
    %87 = arith.addf %85, %86 : vector<8x128xf32>
    %88 = math.tanh %87 : vector<8x128xf32>
    %89 = arith.mulf %84, %88 : vector<8x128xf32>
    %c32 = arith.constant 32 : index
    %c0_24 = arith.constant 0 : index
    %90 = vector.load %arg8[%c32, %c0_24] : memref<64x512xf32, #tpu.memory_space<vmem>>, vector<8x512xf32>
    %91 = arith.truncf %89 : vector<8x128xf32> to vector<8x128xbf16>
    %cst_25 = arith.constant dense<0.000000e+00> : vector<8x512xf32>
    %92 = tpu.matmul %91, %7, %cst_25 {dimension_numbers = #tpu.dot_dimension_numbers<[1], [0], [0], [1], [0, 0, 1, 1], [], []>} : vector<8x128xbf16>, vector<128x512xbf16>, vector<8x512xf32> -> vector<8x512xf32>
    %93 = arith.addf %90, %92 : vector<8x512xf32>
    %94 = vector.extract_strided_slice %93 {offsets = [0, 0], sizes = [8, 384], strides = [1, 1]} : vector<8x512xf32> to vector<8x384xf32>
    %95 = arith.negf %94 : vector<8x384xf32>
    %96 = math.exp %95 : vector<8x384xf32>
    %cst_26 = arith.constant 1.000000e+00 : f32
    %97 = vector.broadcast %cst_26 : f32 to vector<8x384xf32>
    %98 = arith.addf %97, %96 : vector<8x384xf32>
    %99 = arith.divf %97, %98 : vector<8x384xf32>
    %100 = vector.extract_strided_slice %93 {offsets = [0, 384], sizes = [8, 128], strides = [1, 1]} : vector<8x512xf32> to vector<8x128xf32>
    %101 = math.tanh %100 : vector<8x128xf32>
    %102 = vector.extract_strided_slice %99 {offsets = [0, 0], sizes = [8, 128], strides = [1, 1]} : vector<8x384xf32> to vector<8x128xf32>
    %103 = vector.extract_strided_slice %99 {offsets = [0, 128], sizes = [8, 128], strides = [1, 1]} : vector<8x384xf32> to vector<8x128xf32>
    %104 = vector.extract_strided_slice %99 {offsets = [0, 256], sizes = [8, 128], strides = [1, 1]} : vector<8x384xf32> to vector<8x128xf32>
    %105 = arith.mulf %103, %87 : vector<8x128xf32>
    %106 = arith.mulf %102, %101 : vector<8x128xf32>
    %107 = arith.addf %105, %106 : vector<8x128xf32>
    %108 = math.tanh %107 : vector<8x128xf32>
    %109 = arith.mulf %104, %108 : vector<8x128xf32>
    %c40 = arith.constant 40 : index
    %c0_27 = arith.constant 0 : index
    %110 = vector.load %arg8[%c40, %c0_27] : memref<64x512xf32, #tpu.memory_space<vmem>>, vector<8x512xf32>
    %111 = arith.truncf %109 : vector<8x128xf32> to vector<8x128xbf16>
    %cst_28 = arith.constant dense<0.000000e+00> : vector<8x512xf32>
    %112 = tpu.matmul %111, %7, %cst_28 {dimension_numbers = #tpu.dot_dimension_numbers<[1], [0], [0], [1], [0, 0, 1, 1], [], []>} : vector<8x128xbf16>, vector<128x512xbf16>, vector<8x512xf32> -> vector<8x512xf32>
    %113 = arith.addf %110, %112 : vector<8x512xf32>
    %114 = vector.extract_strided_slice %113 {offsets = [0, 0], sizes = [8, 384], strides = [1, 1]} : vector<8x512xf32> to vector<8x384xf32>
    %115 = arith.negf %114 : vector<8x384xf32>
    %116 = math.exp %115 : vector<8x384xf32>
    %cst_29 = arith.constant 1.000000e+00 : f32
    %117 = vector.broadcast %cst_29 : f32 to vector<8x384xf32>
    %118 = arith.addf %117, %116 : vector<8x384xf32>
    %119 = arith.divf %117, %118 : vector<8x384xf32>
    %120 = vector.extract_strided_slice %113 {offsets = [0, 384], sizes = [8, 128], strides = [1, 1]} : vector<8x512xf32> to vector<8x128xf32>
    %121 = math.tanh %120 : vector<8x128xf32>
    %122 = vector.extract_strided_slice %119 {offsets = [0, 0], sizes = [8, 128], strides = [1, 1]} : vector<8x384xf32> to vector<8x128xf32>
    %123 = vector.extract_strided_slice %119 {offsets = [0, 128], sizes = [8, 128], strides = [1, 1]} : vector<8x384xf32> to vector<8x128xf32>
    %124 = vector.extract_strided_slice %119 {offsets = [0, 256], sizes = [8, 128], strides = [1, 1]} : vector<8x384xf32> to vector<8x128xf32>
    %125 = arith.mulf %123, %107 : vector<8x128xf32>
    %126 = arith.mulf %122, %121 : vector<8x128xf32>
    %127 = arith.addf %125, %126 : vector<8x128xf32>
    %128 = math.tanh %127 : vector<8x128xf32>
    %129 = arith.mulf %124, %128 : vector<8x128xf32>
    %c48 = arith.constant 48 : index
    %c0_30 = arith.constant 0 : index
    %130 = vector.load %arg8[%c48, %c0_30] : memref<64x512xf32, #tpu.memory_space<vmem>>, vector<8x512xf32>
    %131 = arith.truncf %129 : vector<8x128xf32> to vector<8x128xbf16>
    %cst_31 = arith.constant dense<0.000000e+00> : vector<8x512xf32>
    %132 = tpu.matmul %131, %7, %cst_31 {dimension_numbers = #tpu.dot_dimension_numbers<[1], [0], [0], [1], [0, 0, 1, 1], [], []>} : vector<8x128xbf16>, vector<128x512xbf16>, vector<8x512xf32> -> vector<8x512xf32>
    %133 = arith.addf %130, %132 : vector<8x512xf32>
    %134 = vector.extract_strided_slice %133 {offsets = [0, 0], sizes = [8, 384], strides = [1, 1]} : vector<8x512xf32> to vector<8x384xf32>
    %135 = arith.negf %134 : vector<8x384xf32>
    %136 = math.exp %135 : vector<8x384xf32>
    %cst_32 = arith.constant 1.000000e+00 : f32
    %137 = vector.broadcast %cst_32 : f32 to vector<8x384xf32>
    %138 = arith.addf %137, %136 : vector<8x384xf32>
    %139 = arith.divf %137, %138 : vector<8x384xf32>
    %140 = vector.extract_strided_slice %133 {offsets = [0, 384], sizes = [8, 128], strides = [1, 1]} : vector<8x512xf32> to vector<8x128xf32>
    %141 = math.tanh %140 : vector<8x128xf32>
    %142 = vector.extract_strided_slice %139 {offsets = [0, 0], sizes = [8, 128], strides = [1, 1]} : vector<8x384xf32> to vector<8x128xf32>
    %143 = vector.extract_strided_slice %139 {offsets = [0, 128], sizes = [8, 128], strides = [1, 1]} : vector<8x384xf32> to vector<8x128xf32>
    %144 = vector.extract_strided_slice %139 {offsets = [0, 256], sizes = [8, 128], strides = [1, 1]} : vector<8x384xf32> to vector<8x128xf32>
    %145 = arith.mulf %143, %127 : vector<8x128xf32>
    %146 = arith.mulf %142, %141 : vector<8x128xf32>
    %147 = arith.addf %145, %146 : vector<8x128xf32>
    %148 = math.tanh %147 : vector<8x128xf32>
    %149 = arith.mulf %144, %148 : vector<8x128xf32>
    %c56 = arith.constant 56 : index
    %c0_33 = arith.constant 0 : index
    %150 = vector.load %arg8[%c56, %c0_33] : memref<64x512xf32, #tpu.memory_space<vmem>>, vector<8x512xf32>
    %151 = arith.truncf %149 : vector<8x128xf32> to vector<8x128xbf16>
    %cst_34 = arith.constant dense<0.000000e+00> : vector<8x512xf32>
    %152 = tpu.matmul %151, %7, %cst_34 {dimension_numbers = #tpu.dot_dimension_numbers<[1], [0], [0], [1], [0, 0, 1, 1], [], []>} : vector<8x128xbf16>, vector<128x512xbf16>, vector<8x512xf32> -> vector<8x512xf32>
    %153 = arith.addf %150, %152 : vector<8x512xf32>
    %154 = vector.extract_strided_slice %153 {offsets = [0, 0], sizes = [8, 384], strides = [1, 1]} : vector<8x512xf32> to vector<8x384xf32>
    %155 = arith.negf %154 : vector<8x384xf32>
    %156 = math.exp %155 : vector<8x384xf32>
    %cst_35 = arith.constant 1.000000e+00 : f32
    %157 = vector.broadcast %cst_35 : f32 to vector<8x384xf32>
    %158 = arith.addf %157, %156 : vector<8x384xf32>
    %159 = arith.divf %157, %158 : vector<8x384xf32>
    %160 = vector.extract_strided_slice %153 {offsets = [0, 384], sizes = [8, 128], strides = [1, 1]} : vector<8x512xf32> to vector<8x128xf32>
    %161 = math.tanh %160 : vector<8x128xf32>
    %162 = vector.extract_strided_slice %159 {offsets = [0, 0], sizes = [8, 128], strides = [1, 1]} : vector<8x384xf32> to vector<8x128xf32>
    %163 = vector.extract_strided_slice %159 {offsets = [0, 128], sizes = [8, 128], strides = [1, 1]} : vector<8x384xf32> to vector<8x128xf32>
    %164 = vector.extract_strided_slice %159 {offsets = [0, 256], sizes = [8, 128], strides = [1, 1]} : vector<8x384xf32> to vector<8x128xf32>
    %165 = arith.mulf %163, %147 : vector<8x128xf32>
    %166 = arith.mulf %162, %161 : vector<8x128xf32>
    %167 = arith.addf %165, %166 : vector<8x128xf32>
    %168 = math.tanh %167 : vector<8x128xf32>
    %169 = arith.mulf %164, %168 : vector<8x128xf32>
    %170 = arith.truncf %169 : vector<8x128xf32> to vector<8x128xbf16>
    %c0_36 = arith.constant 0 : index
    %c0_37 = arith.constant 0 : index
    %171 = vector.load %arg4[%c0_36, %c0_37] : memref<128x64xbf16, #tpu.memory_space<vmem>>, vector<128x64xbf16>
    %cst_38 = arith.constant dense<0.000000e+00> : vector<8x64xf32>
    %172 = tpu.matmul %170, %171, %cst_38 {dimension_numbers = #tpu.dot_dimension_numbers<[1], [0], [0], [1], [0, 0, 1, 1], [], []>} : vector<8x128xbf16>, vector<128x64xbf16>, vector<8x64xf32> -> vector<8x64xf32>
    %c0_39 = arith.constant 0 : index
    %c0_40 = arith.constant 0 : index
    %173 = vector.load %arg5[%c0_39, %c0_40] : memref<1x64xf32, #tpu.memory_space<vmem>>, vector<1x64xf32>
    %174 = vector.broadcast %173 : vector<1x64xf32> to vector<8x64xf32>
    %175 = arith.addf %172, %174 : vector<8x64xf32>
    %176 = vector.extract_strided_slice %175 {offsets = [0, 0], sizes = [8, 32], strides = [1, 1]} : vector<8x64xf32> to vector<8x32xf32>
    %c0_41 = arith.constant 0 : index
    %c0_42 = arith.constant 0 : index
    %177 = vector.load %arg6[%c0_41, %c0_42] : memref<8x32xf32, #tpu.memory_space<vmem>>, vector<8x32xf32>
    tpu.vector_store %arg6[%c0_41, %c0_42], %176 {strides = array<i32>} : memref<8x32xf32, #tpu.memory_space<vmem>>, vector<8x32xf32>,
    %178 = vector.extract_strided_slice %175 {offsets = [0, 32], sizes = [8, 32], strides = [1, 1]} : vector<8x64xf32> to vector<8x32xf32>
    %cst_43 = arith.constant 1.000000e+00 : f32
    %179 = vector.broadcast %cst_43 : f32 to vector<8x32xf32>
    %180 = arith.addf %178, %179 : vector<8x32xf32>
    %181 = math.log %180 : vector<8x32xf32>
    %c0_44 = arith.constant 0 : index
    %c0_45 = arith.constant 0 : index
    %182 = vector.load %arg7[%c0_44, %c0_45] : memref<8x32xf32, #tpu.memory_space<vmem>>, vector<8x32xf32>
    tpu.vector_store %arg7[%c0_44, %c0_45], %181 {strides = array<i32>} : memref<8x32xf32, #tpu.memory_space<vmem>>, vector<8x32xf32>,
    return
  }
}

</mosaic_0001>

<llo_original>
// kernel: tpu_custom_call.1
$region0: #{tpu_custom_call.1}
  #allocation0 [shape = 'u32[]', space=smem, size = 0x4, offset = 0x4, fixed_abs, tag = 'smem constant byte address 0x4 - core index']
  #allocation1 [shape = 'u32[72,128]{1,0:T(1,128)}', space=vmem, size = 0x9000, scoped, tag = 'internal scratch']
  #allocation2 [shape = 'f32[64,512]{1,0:T(8,128)}', space=vmem, size = 0x20000, scoped, tag = 'scratch operand']
  %s0 = inlined_call_operand.vmem [shape: bf16[64,8], index: 0, kind: input, shape index: {}]
  %s1 = inlined_call_operand.vmem [shape: bf16[8,512], index: 1, kind: input, shape index: {}]
  %s2 = inlined_call_operand.vmem [shape: f32[1,512], index: 2, kind: input, shape index: {}]
  %s3 = inlined_call_operand.hbm [shape: bf16[128,512], index: 3, kind: input, shape index: {}]
  %s4 = inlined_call_operand.vmem [shape: bf16[128,64], index: 4, kind: input, shape index: {}]
  %s5 = inlined_call_operand.vmem [shape: f32[1,64], index: 5, kind: input, shape index: {}]
  %s6 = inlined_call_operand.hbm [shape: f32[8,32], index: 6, kind: output, shape index: {0}]
  %s7 = inlined_call_operand.hbm [shape: f32[8,32], index: 7, kind: output, shape index: {1}]
  %8 = xla_tuple %s6, %s7
  %s9 = sld [smem:[#allocation0]]
  $region46: #{tpu_custom_call.1} parent=0
    _
  %s11 = ssub.s32 1, %s9
  %s12 = scalar_select 0, %s11, %s9
  $region1: #{tpu_custom_call.1} parent=0
    #allocation3 [shape = 'u8[131072]{0}', space=vmem, size = 0x20000, scoped, tag = 'input window, operand 3, single buffered']
    #allocation4 [shape = 's32[1]{0}', space=sflag, size = 0x4, scoped, tag = 'scoped memory for tpu_custom_call.1']
    #allocation5 [shape = 's32[1]{0}', space=sflag, size = 0x4, scoped, tag = 'scoped memory for tpu_custom_call.1']
    #allocation6 [shape = 'u8[4096]{0}', space=vmem, size = 0x1000, scoped, tag = 'output window, operand 0, single buffered']
    #allocation7 [shape = 'u8[4096]{0}', space=vmem, size = 0x1000, scoped, tag = 'output window, operand 1, single buffered']
    #allocation8 [shape = 's32[1]{0}', space=sflag, size = 0x4, scoped, tag = 'scoped memory for tpu_custom_call.1']
    %13 = vsyncpa [#allocation4], 0
    %14 = vsyncpa [#allocation5], 0
    %15 = vsyncpa [#allocation8], 0
    // Predicated region
    $region2: #{tpu_custom_call.1} parent=1 // pred_check
      _
    $region3: #{tpu_custom_call.1} parent=1 // pred_check_branch
      %17 = sbr.rel (0) target = $region5
    $region4: #{tpu_custom_call.1} parent=1 // pred_region
      _
    $region5: #{tpu_custom_call.1} parent=1 // pred_fallthru
      _
    // Predicated region
    $region6: #{tpu_custom_call.1} parent=1 // pred_check
      _
    $region7: #{tpu_custom_call.1} parent=1 // pred_check_branch
      %19 = sbr.rel (0) target = $region9
    $region8: #{tpu_custom_call.1} parent=1 // pred_region
      _
    $region9: #{tpu_custom_call.1} parent=1 // pred_fallthru
      _
    // Predicated region
    $region10: #{tpu_custom_call.1} parent=1 // pred_check
      _
    $region11: #{tpu_custom_call.1} parent=1 // pred_check_branch
      %21 = sbr.rel (0) target = $region13
    $region12: #{tpu_custom_call.1} parent=1 // pred_region
      _
    $region13: #{tpu_custom_call.1} parent=1 // pred_fallthru
      _
    // Predicated region
    $region14: #{tpu_custom_call.1} parent=1 // pred_check
      _
    $region15: #{tpu_custom_call.1} parent=1 // pred_check_branch
      %23 = sbr.rel (0) target = $region17
    $region16: #{tpu_custom_call.1} parent=1 // pred_region
      %25 = vsyncadd [#allocation4], 0
      %s26 = sshll.u32 %s3, 4
      %s27 = int_to_ptr.hbm [resolvable:$true] %s26
      %s28 = sshll.u32 [#allocation3], 4
      %s29 = int_to_ptr.vmem [resolvable:$true] %s28
      %34 = dma.hbm_to_vmem [thread:$0]  %s27, 4096, %s29, [#allocation4], 256, 256, 16
    $region17: #{tpu_custom_call.1} parent=1 // pred_fallthru
      _
    // Predicated region
    $region18: #{tpu_custom_call.1} parent=1 // pred_check
      _
    $region19: #{tpu_custom_call.1} parent=1 // pred_check_branch
      %36 = sbr.rel (0) target = $region21
    $region20: #{tpu_custom_call.1} parent=1 // pred_region
      _
    $region21: #{tpu_custom_call.1} parent=1 // pred_fallthru
      _
    // Predicated region
    $region22: #{tpu_custom_call.1} parent=1 // pred_check
      _
    $region23: #{tpu_custom_call.1} parent=1 // pred_check_branch
      %38 = sbr.rel (0) target = $region25
    $region24: #{tpu_custom_call.1} parent=1 // pred_region
      _
    $region25: #{tpu_custom_call.1} parent=1 // pred_fallthru
      _
    // Predicated region
    $region26: #{tpu_custom_call.1} parent=1 // pred_check
      _
    $region27: #{tpu_custom_call.1} parent=1 // pred_check_branch
      %40 = sbr.rel (0) target = $region29
    $region28: #{tpu_custom_call.1} parent=1 // pred_region
      %42 = dma.done [#allocation4], 4096
    $region29: #{tpu_custom_call.1} parent=1 // pred_fallthru
      _
    %v44 = vld [vmem:[%s0] sm:$0xf]
    %v45 = vld [vmem:[%s0 + $0x4] sm:$0xf]
    %v46 = vld [vmem:[%s0 + $0x8] sm:$0xf]
    %v47 = vld [vmem:[%s0 + $0xc] sm:$0xf]
    %v48 = vld [vmem:[%s0 + $0x10] sm:$0xf]
    %v49 = vld [vmem:[%s0 + $0x14] sm:$0xf]
    %v50 = vld [vmem:[%s0 + $0x18] sm:$0xf]
    %v51 = vld [vmem:[%s0 + $0x1c] sm:$0xf]
    %v52 = vld [vmem:[%s1] sm:$0xff]
    %v53 = vld [vmem:[%s1 + $0x8] sm:$0xff]
    %v54 = vld [vmem:[%s2] sm:$0xf]
    %v56 = vperm.slane %v54, 0
    %v57 = vperm.slane %v54, 1
    %v58 = vperm.slane %v54, 2
    %v59 = vperm.slane %v54, 3
    %v72 = vunpack.c.l.b16 %v44
    %v73 = vunpack.c.l.b16 %v45
    %v74 = vunpack.c.l.b16 %v46
    %v75 = vunpack.c.l.b16 %v47
    %v76 = vunpack.c.l.b16 %v48
    %v77 = vunpack.c.l.b16 %v49
    %v78 = vunpack.c.l.b16 %v50
    %v79 = vunpack.c.l.b16 %v51
    %v80 = vpack.c.b16 %v73, %v72
    %v81 = vpack.c.b16 %v75, %v74
    %v82 = vpack.c.b16 %v77, %v76
    %v83 = vpack.c.b16 %v79, %v78
    %v86 = vunpack.c.l.b16 %v52
    %v87 = vunpack.c.h.b16 %v52
    %v88 = vunpack.c.l.b16 %v53
    %v89 = vunpack.c.h.b16 %v53
    %v90 = vpack.c.b16 %v86, %v86
    %v91 = vpack.c.b16 %v87, %v87
    %v92 = vpack.c.b16 %v88, %v88
    %v93 = vpack.c.b16 %v89, %v89
    %vm94 = vcmask 64512
    %v96 = vsel %vm94, %v80, 0
    %v99 = vsel %vm94, %v81, 0
    %v102 = vsel %vm94, %v82, 0
    %v105 = vsel %vm94, %v83, 0
    %vm107 = vcmask 1043456
    %v109 = vsel %vm107, %v90, 0
    %v112 = vsel %vm107, %v91, 0
    %v115 = vsel %vm107, %v92, 0
    %v118 = vsel %vm107, %v93, 0
    %120 = vmatpush.bf16.msra.mxu0 0
    %121 = vmatpush.bf16.msra.mxu0 0
    %122 = vmatpush.bf16.msra.mxu0 0
    %123 = vmatpush.bf16.msra.mxu0 0
    %124 = vmatpush.bf16.msra.mxu0 0
    %125 = vmatpush.bf16.msra.mxu0 0
    %126 = vmatpush.bf16.msra.mxu0 0
    %127 = vmatpush.bf16.msra.mxu0 %v109
    %128 = vmatmul.bf16.gmra.mxu0 %v96
    %v129 = vpop.f32.mrf.mxu0
    %v130 = vadd.f32 %v56, %v129
    %v131 = vpop.f32.mrf.mxu0
    %v132 = vadd.f32 %v56, %v131
    %133 = vmatmul.bf16.gmra.mxu0 %v99
    %v134 = vpop.f32.mrf.mxu0
    %v135 = vadd.f32 %v56, %v134
    %v136 = vpop.f32.mrf.mxu0
    %v137 = vadd.f32 %v56, %v136
    %138 = vmatmul.bf16.gmra.mxu0 %v102
    %v139 = vpop.f32.mrf.mxu0
    %v140 = vadd.f32 %v56, %v139
    %v141 = vpop.f32.mrf.mxu0
    %v142 = vadd.f32 %v56, %v141
    %143 = vmatmul.bf16.gmra.mxu0 %v105
    %v144 = vpop.f32.mrf.mxu0
    %v145 = vadd.f32 %v56, %v144
    %v146 = vpop.f32.mrf.mxu0
    %v147 = vadd.f32 %v56, %v146
    %148 = vdwg.mxu0
    %149 = vmatpush.bf16.msra.mxu0 0
    %150 = vmatpush.bf16.msra.mxu0 0
    %151 = vmatpush.bf16.msra.mxu0 0
    %152 = vmatpush.bf16.msra.mxu0 0
    %153 = vmatpush.bf16.msra.mxu0 0
    %154 = vmatpush.bf16.msra.mxu0 0
    %155 = vmatpush.bf16.msra.mxu0 0
    %156 = vmatpush.bf16.msra.mxu0 %v112
    %157 = vmatmul.bf16.gmra.mxu0 %v96
    %v158 = vpop.f32.mrf.mxu0
    %v159 = vadd.f32 %v57, %v158
    %v160 = vpop.f32.mrf.mxu0
    %v161 = vadd.f32 %v57, %v160
    %162 = vmatmul.bf16.gmra.mxu0 %v99
    %v163 = vpop.f32.mrf.mxu0
    %v164 = vadd.f32 %v57, %v163
    %v165 = vpop.f32.mrf.mxu0
    %v166 = vadd.f32 %v57, %v165
    %167 = vmatmul.bf16.gmra.mxu0 %v102
    %v168 = vpop.f32.mrf.mxu0
    %v169 = vadd.f32 %v57, %v168
    %v170 = vpop.f32.mrf.mxu0
    %v171 = vadd.f32 %v57, %v170
    %172 = vmatmul.bf16.gmra.mxu0 %v105
    %v173 = vpop.f32.mrf.mxu0
    %v174 = vadd.f32 %v57, %v173
    %v175 = vpop.f32.mrf.mxu0
    %v176 = vadd.f32 %v57, %v175
    %177 = vdwg.mxu0
    %178 = vmatpush.bf16.msra.mxu0 0
    %179 = vmatpush.bf16.msra.mxu0 0
    %180 = vmatpush.bf16.msra.mxu0 0
    %181 = vmatpush.bf16.msra.mxu0 0
    %182 = vmatpush.bf16.msra.mxu0 0
    %183 = vmatpush.bf16.msra.mxu0 0
    %184 = vmatpush.bf16.msra.mxu0 0
    %185 = vmatpush.bf16.msra.mxu0 %v115
    %186 = vmatmul.bf16.gmra.mxu0 %v96
    %v187 = vpop.f32.mrf.mxu0
    %v188 = vadd.f32 %v58, %v187
    %v189 = vpop.f32.mrf.mxu0
    %v190 = vadd.f32 %v58, %v189
    %191 = vmatmul.bf16.gmra.mxu0 %v99
    %v192 = vpop.f32.mrf.mxu0
    %v193 = vadd.f32 %v58, %v192
    %v194 = vpop.f32.mrf.mxu0
    %v195 = vadd.f32 %v58, %v194
    %196 = vmatmul.bf16.gmra.mxu0 %v102
    %v197 = vpop.f32.mrf.mxu0
    %v198 = vadd.f32 %v58, %v197
    %v199 = vpop.f32.mrf.mxu0
    %v200 = vadd.f32 %v58, %v199
    %201 = vmatmul.bf16.gmra.mxu0 %v105
    %v202 = vpop.f32.mrf.mxu0
    %v203 = vadd.f32 %v58, %v202
    %v204 = vpop.f32.mrf.mxu0
    %v205 = vadd.f32 %v58, %v204
    %206 = vdwg.mxu0
    %207 = vmatpush.bf16.msra.mxu0 0
    %208 = vmatpush.bf16.msra.mxu0 0
    %209 = vmatpush.bf16.msra.mxu0 0
    %210 = vmatpush.bf16.msra.mxu0 0
    %211 = vmatpush.bf16.msra.mxu0 0
    %212 = vmatpush.bf16.msra.mxu0 0
    %213 = vmatpush.bf16.msra.mxu0 0
    %214 = vmatpush.bf16.msra.mxu0 %v118
    %215 = vmatmul.bf16.gmra.mxu0 %v96
    %v216 = vpop.f32.mrf.mxu0
    %v217 = vadd.f32 %v59, %v216
    %v218 = vpop.f32.mrf.mxu0
    %v219 = vadd.f32 %v59, %v218
    %220 = vmatmul.bf16.gmra.mxu0 %v99
    %v221 = vpop.f32.mrf.mxu0
    %v222 = vadd.f32 %v59, %v221
    %v223 = vpop.f32.mrf.mxu0
    %v224 = vadd.f32 %v59, %v223
    %225 = vmatmul.bf16.gmra.mxu0 %v102
    %v226 = vpop.f32.mrf.mxu0
    %v227 = vadd.f32 %v59, %v226
    %v228 = vpop.f32.mrf.mxu0
    %v229 = vadd.f32 %v59, %v228
    %230 = vmatmul.bf16.gmra.mxu0 %v105
    %v231 = vpop.f32.mrf.mxu0
    %v232 = vadd.f32 %v59, %v231
    %v233 = vpop.f32.mrf.mxu0
    %v234 = vadd.f32 %v59, %v233
    %235 = vdwg.mxu0
    %236 = vst [vmem:[#allocation2] sm:$0xff] %v130
    %237 = vst [vmem:[#allocation2 + $0x8] sm:$0xff] %v159
    %238 = vst [vmem:[#allocation2 + $0x10] sm:$0xff] %v188
    %239 = vst [vmem:[#allocation2 + $0x18] sm:$0xff] %v217
    %240 = vst [vmem:[#allocation2 + $0x20] sm:$0xff] %v132
    %241 = vst [vmem:[#allocation2 + $0x28] sm:$0xff] %v161
    %242 = vst [vmem:[#allocation2 + $0x30] sm:$0xff] %v190
    %243 = vst [vmem:[#allocation2 + $0x38] sm:$0xff] %v219
    %244 = vst [vmem:[#allocation2 + $0x40] sm:$0xff] %v135
    %245 = vst [vmem:[#allocation2 + $0x48] sm:$0xff] %v164
    %246 = vst [vmem:[#allocation2 + $0x50] sm:$0xff] %v193
    %247 = vst [vmem:[#allocation2 + $0x58] sm:$0xff] %v222
    %248 = vst [vmem:[#allocation2 + $0x60] sm:$0xff] %v137
    %249 = vst [vmem:[#allocation2 + $0x68] sm:$0xff] %v166
    %250 = vst [vmem:[#allocation2 + $0x70] sm:$0xff] %v195
    %251 = vst [vmem:[#allocation2 + $0x78] sm:$0xff] %v224
    %252 = vst [vmem:[#allocation2 + $0x80] sm:$0xff] %v140
    %253 = vst [vmem:[#allocation2 + $0x88] sm:$0xff] %v169
    %254 = vst [vmem:[#allocation2 + $0x90] sm:$0xff] %v198
    %255 = vst [vmem:[#allocation2 + $0x98] sm:$0xff] %v227
    %256 = vst [vmem:[#allocation2 + $0xa0] sm:$0xff] %v142
    %257 = vst [vmem:[#allocation2 + $0xa8] sm:$0xff] %v171
    %258 = vst [vmem:[#allocation2 + $0xb0] sm:$0xff] %v200
    %259 = vst [vmem:[#allocation2 + $0xb8] sm:$0xff] %v229
    %260 = vst [vmem:[#allocation2 + $0xc0] sm:$0xff] %v145
    %261 = vst [vmem:[#allocation2 + $0xc8] sm:$0xff] %v174
    %262 = vst [vmem:[#allocation2 + $0xd0] sm:$0xff] %v203
    %263 = vst [vmem:[#allocation2 + $0xd8] sm:$0xff] %v232
    %264 = vst [vmem:[#allocation2 + $0xe0] sm:$0xff] %v147
    %265 = vst [vmem:[#allocation2 + $0xe8] sm:$0xff] %v176
    %266 = vst [vmem:[#allocation2 + $0xf0] sm:$0xff] %v205
    %267 = vst [vmem:[#allocation2 + $0xf8] sm:$0xff] %v234
    %v268 = vld [vmem:[#allocation3] sm:$0xff]
    %v269 = vld [vmem:[#allocation3 + $0x8] sm:$0xff]
    %v270 = vld [vmem:[#allocation3 + $0x10] sm:$0xff]
    %v271 = vld [vmem:[#allocation3 + $0x18] sm:$0xff]
    %v272 = vld [vmem:[#allocation3 + $0x20] sm:$0xff]
    %v273 = vld [vmem:[#allocation3 + $0x28] sm:$0xff]
    %v274 = vld [vmem:[#allocation3 + $0x30] sm:$0xff]
    %v275 = vld [vmem:[#allocation3 + $0x38] sm:$0xff]
    %v276 = vld [vmem:[#allocation3 + $0x40] sm:$0xff]
    %v277 = vld [vmem:[#allocation3 + $0x48] sm:$0xff]
    %v278 = vld [vmem:[#allocation3 + $0x50] sm:$0xff]
    %v279 = vld [vmem:[#allocation3 + $0x58] sm:$0xff]
    %v280 = vld [vmem:[#allocation3 + $0x60] sm:$0xff]
    %v281 = vld [vmem:[#allocation3 + $0x68] sm:$0xff]
    %v282 = vld [vmem:[#allocation3 + $0x70] sm:$0xff]
    %v283 = vld [vmem:[#allocation3 + $0x78] sm:$0xff]
    %v284 = vld [vmem:[#allocation3 + $0x80] sm:$0xff]
    %v285 = vld [vmem:[#allocation3 + $0x88] sm:$0xff]
    %v286 = vld [vmem:[#allocation3 + $0x90] sm:$0xff]
    %v287 = vld [vmem:[#allocation3 + $0x98] sm:$0xff]
    %v288 = vld [vmem:[#allocation3 + $0xa0] sm:$0xff]
    %v289 = vld [vmem:[#allocation3 + $0xa8] sm:$0xff]
    %v290 = vld [vmem:[#allocation3 + $0xb0] sm:$0xff]
    %v291 = vld [vmem:[#allocation3 + $0xb8] sm:$0xff]
    %v292 = vld [vmem:[#allocation3 + $0xc0] sm:$0xff]
    %v293 = vld [vmem:[#allocation3 + $0xc8] sm:$0xff]
    %v294 = vld [vmem:[#allocation3 + $0xd0] sm:$0xff]
    %v295 = vld [vmem:[#allocation3 + $0xd8] sm:$0xff]
    %v296 = vld [vmem:[#allocation3 + $0xe0] sm:$0xff]
    %v297 = vld [vmem:[#allocation3 + $0xe8] sm:$0xff]
    %v298 = vld [vmem:[#allocation3 + $0xf0] sm:$0xff]
    %v299 = vld [vmem:[#allocation3 + $0xf8] sm:$0xff]
    %v300 = vld [vmem:[#allocation2] sm:$0xff]
    %v301 = vld [vmem:[#allocation2 + $0x8] sm:$0xff]
    %v302 = vld [vmem:[#allocation2 + $0x10] sm:$0xff]
    %v303 = vld [vmem:[#allocation2 + $0x18] sm:$0xff]
    %v336 = vunpack.c.l.b16 %v268
    %v337 = vunpack.c.h.b16 %v268
    %v338 = vunpack.c.l.b16 %v269
    %v339 = vunpack.c.h.b16 %v269
    %v340 = vunpack.c.l.b16 %v270
    %v341 = vunpack.c.h.b16 %v270
    %v342 = vunpack.c.l.b16 %v271
    %v343 = vunpack.c.h.b16 %v271
    %v344 = vunpack.c.l.b16 %v272
    %v345 = vunpack.c.h.b16 %v272
    %v346 = vunpack.c.l.b16 %v273
    %v347 = vunpack.c.h.b16 %v273
    %v348 = vunpack.c.l.b16 %v274
    %v349 = vunpack.c.h.b16 %v274
    %v350 = vunpack.c.l.b16 %v275
    %v351 = vunpack.c.h.b16 %v275
    %v352 = vunpack.c.l.b16 %v276
    %v353 = vunpack.c.h.b16 %v276
    %v354 = vunpack.c.l.b16 %v277
    %v355 = vunpack.c.h.b16 %v277
    %v356 = vunpack.c.l.b16 %v278
    %v357 = vunpack.c.h.b16 %v278
    %v358 = vunpack.c.l.b16 %v279
    %v359 = vunpack.c.h.b16 %v279
    %v360 = vunpack.c.l.b16 %v280
    %v361 = vunpack.c.h.b16 %v280
    %v362 = vunpack.c.l.b16 %v281
    %v363 = vunpack.c.h.b16 %v281
    %v364 = vunpack.c.l.b16 %v282
    %v365 = vunpack.c.h.b16 %v282
    %v366 = vunpack.c.l.b16 %v283
    %v367 = vunpack.c.h.b16 %v283
    %v368 = vunpack.c.l.b16 %v284
    %v369 = vunpack.c.h.b16 %v284
    %v370 = vunpack.c.l.b16 %v285
    %v371 = vunpack.c.h.b16 %v285
    %v372 = vunpack.c.l.b16 %v286
    %v373 = vunpack.c.h.b16 %v286
    %v374 = vunpack.c.l.b16 %v287
    %v375 = vunpack.c.h.b16 %v287
    %v376 = vunpack.c.l.b16 %v288
    %v377 = vunpack.c.h.b16 %v288
    %v378 = vunpack.c.l.b16 %v289
    %v379 = vunpack.c.h.b16 %v289
    %v380 = vunpack.c.l.b16 %v290
    %v381 = vunpack.c.h.b16 %v290
    %v382 = vunpack.c.l.b16 %v291
    %v383 = vunpack.c.h.b16 %v291
    %v384 = vunpack.c.l.b16 %v292
    %v385 = vunpack.c.h.b16 %v292
    %v386 = vunpack.c.l.b16 %v293
    %v387 = vunpack.c.h.b16 %v293
    %v388 = vunpack.c.l.b16 %v294
    %v389 = vunpack.c.h.b16 %v294
    %v390 = vunpack.c.l.b16 %v295
    %v391 = vunpack.c.h.b16 %v295
    %v392 = vunpack.c.l.b16 %v296
    %v393 = vunpack.c.h.b16 %v296
    %v394 = vunpack.c.l.b16 %v297
    %v395 = vunpack.c.h.b16 %v297
    %v396 = vunpack.c.l.b16 %v298
    %v397 = vunpack.c.h.b16 %v298
    %v398 = vunpack.c.l.b16 %v299
    %v399 = vunpack.c.h.b16 %v299
    %v400 = vpack.c.b16 %v340, %v336
    %v401 = vpack.c.b16 %v341, %v337
    %v402 = vpack.c.b16 %v342, %v338
    %v403 = vpack.c.b16 %v343, %v339
    %v404 = vpack.c.b16 %v348, %v344
    %v405 = vpack.c.b16 %v349, %v345
    %v406 = vpack.c.b16 %v350, %v346
    %v407 = vpack.c.b16 %v351, %v347
    %v408 = vpack.c.b16 %v356, %v352
    %v409 = vpack.c.b16 %v357, %v353
    %v410 = vpack.c.b16 %v358, %v354
    %v411 = vpack.c.b16 %v359, %v355
    %v412 = vpack.c.b16 %v364, %v360
    %v413 = vpack.c.b16 %v365, %v361
    %v414 = vpack.c.b16 %v366, %v362
    %v415 = vpack.c.b16 %v367, %v363
    %v416 = vpack.c.b16 %v372, %v368
    %v417 = vpack.c.b16 %v373, %v369
    %v418 = vpack.c.b16 %v374, %v370
    %v419 = vpack.c.b16 %v375, %v371
    %v420 = vpack.c.b16 %v380, %v376
    %v421 = vpack.c.b16 %v381, %v377
    %v422 = vpack.c.b16 %v382, %v378
    %v423 = vpack.c.b16 %v383, %v379
    %v424 = vpack.c.b16 %v388, %v384
    %v425 = vpack.c.b16 %v389, %v385
    %v426 = vpack.c.b16 %v390, %v386
    %v427 = vpack.c.b16 %v391, %v387
    %v428 = vpack.c.b16 %v396, %v392
    %v429 = vpack.c.b16 %v397, %v393
    %v430 = vpack.c.b16 %v398, %v394
    %v431 = vpack.c.b16 %v399, %v395
    %464 = vmatpush.bf16.msra.mxu0 %v428
    %465 = vmatpush.bf16.msra.mxu0 %v424
    %466 = vmatpush.bf16.msra.mxu0 %v420
    %467 = vmatpush.bf16.msra.mxu0 %v416
    %468 = vmatpush.bf16.msra.mxu0 %v412
    %469 = vmatpush.bf16.msra.mxu0 %v408
    %470 = vmatpush.bf16.msra.mxu0 %v404
    %471 = vmatpush.bf16.msra.mxu0 %v400
    %472 = vmatmul.bf16.gmra.mxu0 0
    %v473 = vpop.f32.mrf.mxu0
    %v474 = vadd.f32 0.0, %v473
    %v475 = vpop.f32.mrf.mxu0
    %476 = vdwg.mxu0
    %477 = vmatpush.bf16.msra.mxu0 %v429
    %478 = vmatpush.bf16.msra.mxu0 %v425
    %479 = vmatpush.bf16.msra.mxu0 %v421
    %480 = vmatpush.bf16.msra.mxu0 %v417
    %481 = vmatpush.bf16.msra.mxu0 %v413
    %482 = vmatpush.bf16.msra.mxu0 %v409
    %483 = vmatpush.bf16.msra.mxu0 %v405
    %484 = vmatpush.bf16.msra.mxu0 %v401
    %485 = vmatmul.bf16.gmra.mxu0 0
    %v486 = vpop.f32.mrf.mxu0
    %v487 = vadd.f32 0.0, %v486
    %v488 = vpop.f32.mrf.mxu0
    %489 = vdwg.mxu0
    %490 = vmatpush.bf16.msra.mxu0 %v430
    %491 = vmatpush.bf16.msra.mxu0 %v426
    %492 = vmatpush.bf16.msra.mxu0 %v422
    %493 = vmatpush.bf16.msra.mxu0 %v418
    %494 = vmatpush.bf16.msra.mxu0 %v414
    %495 = vmatpush.bf16.msra.mxu0 %v410
    %496 = vmatpush.bf16.msra.mxu0 %v406
    %497 = vmatpush.bf16.msra.mxu0 %v402
    %498 = vmatmul.bf16.gmra.mxu0 0
    %v499 = vpop.f32.mrf.mxu0
    %v500 = vadd.f32 0.0, %v499
    %v501 = vpop.f32.mrf.mxu0
    %502 = vdwg.mxu0
    %503 = vmatpush.bf16.msra.mxu0 %v431
    %504 = vmatpush.bf16.msra.mxu0 %v427
    %505 = vmatpush.bf16.msra.mxu0 %v423
    %506 = vmatpush.bf16.msra.mxu0 %v419
    %507 = vmatpush.bf16.msra.mxu0 %v415
    %508 = vmatpush.bf16.msra.mxu0 %v411
    %509 = vmatpush.bf16.msra.mxu0 %v407
    %510 = vmatpush.bf16.msra.mxu0 %v403
    %511 = vmatmul.bf16.gmra.mxu0 0
    %v512 = vpop.f32.mrf.mxu0
    %v513 = vadd.f32 0.0, %v512
    %v514 = vpop.f32.mrf.mxu0
    %515 = vdwg.mxu0
    %v516 = vadd.f32 %v300, %v474
    %v517 = vadd.f32 %v301, %v487
    %v518 = vadd.f32 %v302, %v500
    %v519 = vadd.f32 %v303, %v513
    %v520 = vxor.u32 %v516, 2147483648
    %v521 = vxor.u32 %v517, 2147483648
    %v522 = vxor.u32 %v518, 2147483648
    %v523 = vmul.f32 %v520, 1.442695
    %v524 = vpow.pop %v523
    %v525 = vmul.f32 %v521, 1.442695
    %v526 = vpow.pop %v525
    %v527 = vmul.f32 %v522, 1.442695
    %v528 = vpow.pop %v527
    %v529 = vadd.f32 %v524, 1.0
    %v530 = vadd.f32 %v526, 1.0
    %v531 = vadd.f32 %v528, 1.0
    %v532 = vrcp.pop %v529
    %v533 = vmul.f32 %v529, %v532
    %v534 = vsub.f32 1.0, %v533
    %v535 = vmul.f32 %v532, %v534
    %v536 = vadd.f32 %v532, %v535
    %vm537 = vweird.f32 %v529
    %vm538 = vweird.f32 %v532
    %vm539 = vmor %vm537, %vm538
    %v540 = vsel %vm539, %v532, %v536
    %v541 = vand.u32 2147483647, %v529
    %vm542 = vcmp.eq.f32.partialorder %v541, 8.507059e+37
    %v543 = vand.u32 %v529, 2147483648
    %v544 = vor.u32 1.1754944e-38, %v543
    %v545 = vsel %vm542, %v544, %v540
    %v546 = vmul.f32 1.0, %v545
    %v547 = vrcp.pop %v530
    %v548 = vmul.f32 %v530, %v547
    %v549 = vsub.f32 1.0, %v548
    %v550 = vmul.f32 %v547, %v549
    %v551 = vadd.f32 %v547, %v550
    %vm552 = vweird.f32 %v530
    %vm553 = vweird.f32 %v547
    %vm554 = vmor %vm552, %vm553
    %v555 = vsel %vm554, %v547, %v551
    %v556 = vand.u32 2147483647, %v530
    %vm557 = vcmp.eq.f32.partialorder %v556, 8.507059e+37
    %v558 = vand.u32 %v530, 2147483648
    %v559 = vor.u32 1.1754944e-38, %v558
    %v560 = vsel %vm557, %v559, %v555
    %v561 = vmul.f32 1.0, %v560
    %v562 = vrcp.pop %v531
    %v563 = vmul.f32 %v531, %v562
    %v564 = vsub.f32 1.0, %v563
    %v565 = vmul.f32 %v562, %v564
    %v566 = vadd.f32 %v562, %v565
    %vm567 = vweird.f32 %v531
    %vm568 = vweird.f32 %v562
    %vm569 = vmor %vm567, %vm568
    %v570 = vsel %vm569, %v562, %v566
    %v571 = vand.u32 2147483647, %v531
    %vm572 = vcmp.eq.f32.partialorder %v571, 8.507059e+37
    %v573 = vand.u32 %v531, 2147483648
    %v574 = vor.u32 1.1754944e-38, %v573
    %v575 = vsel %vm572, %v574, %v570
    %v576 = vmul.f32 1.0, %v575
    %v577 = vtanh.pop %v519
    %v578 = vmul.f32 %v561, 0.0
    %v579 = vmul.f32 %v546, %v577
    %v580 = vadd.f32 %v578, %v579
    %v581 = vtanh.pop %v580
    %v582 = vmul.f32 %v576, %v581
    %v583 = vld [vmem:[#allocation2 + $0x20] sm:$0xff]
    %v584 = vld [vmem:[#allocation2 + $0x28] sm:$0xff]
    %v585 = vld [vmem:[#allocation2 + $0x30] sm:$0xff]
    %v586 = vld [vmem:[#allocation2 + $0x38] sm:$0xff]
    %v587 = vpack.c.bf16 %v582, %v582
    %588 = vmatpush.bf16.msra.mxu0 %v428
    %589 = vmatpush.bf16.msra.mxu0 %v424
    %590 = vmatpush.bf16.msra.mxu0 %v420
    %591 = vmatpush.bf16.msra.mxu0 %v416
    %592 = vmatpush.bf16.msra.mxu0 %v412
    %593 = vmatpush.bf16.msra.mxu0 %v408
    %594 = vmatpush.bf16.msra.mxu0 %v404
    %595 = vmatpush.bf16.msra.mxu0 %v400
    %596 = vmatmul.bf16.gmra.mxu0 %v587
    %v597 = vpop.f32.mrf.mxu0
    %v598 = vadd.f32 0.0, %v597
    %v599 = vpop.f32.mrf.mxu0
    %600 = vdwg.mxu0
    %601 = vmatpush.bf16.msra.mxu0 %v429
    %602 = vmatpush.bf16.msra.mxu0 %v425
    %603 = vmatpush.bf16.msra.mxu0 %v421
    %604 = vmatpush.bf16.msra.mxu0 %v417
    %605 = vmatpush.bf16.msra.mxu0 %v413
    %606 = vmatpush.bf16.msra.mxu0 %v409
    %607 = vmatpush.bf16.msra.mxu0 %v405
    %608 = vmatpush.bf16.msra.mxu0 %v401
    %609 = vmatmul.bf16.gmra.mxu0 %v587
    %v610 = vpop.f32.mrf.mxu0
    %v611 = vadd.f32 0.0, %v610
    %v612 = vpop.f32.mrf.mxu0
    %613 = vdwg.mxu0
    %614 = vmatpush.bf16.msra.mxu0 %v430
    %615 = vmatpush.bf16.msra.mxu0 %v426
    %616 = vmatpush.bf16.msra.mxu0 %v422
    %617 = vmatpush.bf16.msra.mxu0 %v418
    %618 = vmatpush.bf16.msra.mxu0 %v414
    %619 = vmatpush.bf16.msra.mxu0 %v410
    %620 = vmatpush.bf16.msra.mxu0 %v406
    %621 = vmatpush.bf16.msra.mxu0 %v402
    %622 = vmatmul.bf16.gmra.mxu0 %v587
    %v623 = vpop.f32.mrf.mxu0
    %v624 = vadd.f32 0.0, %v623
    %v625 = vpop.f32.mrf.mxu0
    %626 = vdwg.mxu0
    %627 = vmatpush.bf16.msra.mxu0 %v431
    %628 = vmatpush.bf16.msra.mxu0 %v427
    %629 = vmatpush.bf16.msra.mxu0 %v423
    %630 = vmatpush.bf16.msra.mxu0 %v419
    %631 = vmatpush.bf16.msra.mxu0 %v415
    %632 = vmatpush.bf16.msra.mxu0 %v411
    %633 = vmatpush.bf16.msra.mxu0 %v407
    %634 = vmatpush.bf16.msra.mxu0 %v403
    %635 = vmatmul.bf16.gmra.mxu0 %v587
    %v636 = vpop.f32.mrf.mxu0
    %v637 = vadd.f32 0.0, %v636
    %v638 = vpop.f32.mrf.mxu0
    %639 = vdwg.mxu0
    %v640 = vadd.f32 %v583, %v598
    %v641 = vadd.f32 %v584, %v611
    %v642 = vadd.f32 %v585, %v624
    %v643 = vadd.f32 %v586, %v637
    %v644 = vxor.u32 %v640, 2147483648
    %v645 = vxor.u32 %v641, 2147483648
    %v646 = vxor.u32 %v642, 2147483648
    %v647 = vmul.f32 %v644, 1.442695
    %v648 = vpow.pop %v647
    %v649 = vmul.f32 %v645, 1.442695
    %v650 = vpow.pop %v649
    %v651 = vmul.f32 %v646, 1.442695
    %v652 = vpow.pop %v651
    %v653 = vadd.f32 %v648, 1.0
    %v654 = vadd.f32 %v650, 1.0
    %v655 = vadd.f32 %v652, 1.0
    %v656 = vrcp.pop %v653
    %v657 = vmul.f32 %v653, %v656
    %v658 = vsub.f32 1.0, %v657
    %v659 = vmul.f32 %v656, %v658
    %v660 = vadd.f32 %v656, %v659
    %vm661 = vweird.f32 %v653
    %vm662 = vweird.f32 %v656
    %vm663 = vmor %vm661, %vm662
    %v664 = vsel %vm663, %v656, %v660
    %v665 = vand.u32 2147483647, %v653
    %vm666 = vcmp.eq.f32.partialorder %v665, 8.507059e+37
    %v667 = vand.u32 %v653, 2147483648
    %v668 = vor.u32 1.1754944e-38, %v667
    %v669 = vsel %vm666, %v668, %v664
    %v670 = vmul.f32 1.0, %v669
    %v671 = vrcp.pop %v654
    %v672 = vmul.f32 %v654, %v671
    %v673 = vsub.f32 1.0, %v672
    %v674 = vmul.f32 %v671, %v673
    %v675 = vadd.f32 %v671, %v674
    %vm676 = vweird.f32 %v654
    %vm677 = vweird.f32 %v671
    %vm678 = vmor %vm676, %vm677
    %v679 = vsel %vm678, %v671, %v675
    %v680 = vand.u32 2147483647, %v654
    %vm681 = vcmp.eq.f32.partialorder %v680, 8.507059e+37
    %v682 = vand.u32 %v654, 2147483648
    %v683 = vor.u32 1.1754944e-38, %v682
    %v684 = vsel %vm681, %v683, %v679
    %v685 = vmul.f32 1.0, %v684
    %v686 = vrcp.pop %v655
    %v687 = vmul.f32 %v655, %v686
    %v688 = vsub.f32 1.0, %v687
    %v689 = vmul.f32 %v686, %v688
    %v690 = vadd.f32 %v686, %v689
    %vm691 = vweird.f32 %v655
    %vm692 = vweird.f32 %v686
    %vm693 = vmor %vm691, %vm692
    %v694 = vsel %vm693, %v686, %v690
    %v695 = vand.u32 2147483647, %v655
    %vm696 = vcmp.eq.f32.partialorder %v695, 8.507059e+37
    %v697 = vand.u32 %v655, 2147483648
    %v698 = vor.u32 1.1754944e-38, %v697
    %v699 = vsel %vm696, %v698, %v694
    %v700 = vmul.f32 1.0, %v699
    %v701 = vtanh.pop %v643
    %v702 = vmul.f32 %v685, %v580
    %v703 = vmul.f32 %v670, %v701
    %v704 = vadd.f32 %v702, %v703
    %v705 = vtanh.pop %v704
    %v706 = vmul.f32 %v700, %v705
    %v707 = vld [vmem:[#allocation2 + $0x40] sm:$0xff]
    %v708 = vld [vmem:[#allocation2 + $0x48] sm:$0xff]
    %v709 = vld [vmem:[#allocation2 + $0x50] sm:$0xff]
    %v710 = vld [vmem:[#allocation2 + $0x58] sm:$0xff]
    %v711 = vpack.c.bf16 %v706, %v706
    %712 = vmatpush.bf16.msra.mxu0 %v428
    %713 = vmatpush.bf16.msra.mxu0 %v424
    %714 = vmatpush.bf16.msra.mxu0 %v420
    %715 = vmatpush.bf16.msra.mxu0 %v416
    %716 = vmatpush.bf16.msra.mxu0 %v412
    %717 = vmatpush.bf16.msra.mxu0 %v408
    %718 = vmatpush.bf16.msra.mxu0 %v404
    %719 = vmatpush.bf16.msra.mxu0 %v400
    %720 = vmatmul.bf16.gmra.mxu0 %v711
    %v721 = vpop.f32.mrf.mxu0
    %v722 = vadd.f32 0.0, %v721
    %v723 = vpop.f32.mrf.mxu0
    %724 = vdwg.mxu0
    %725 = vmatpush.bf16.msra.mxu0 %v429
    %726 = vmatpush.bf16.msra.mxu0 %v425
    %727 = vmatpush.bf16.msra.mxu0 %v421
    %728 = vmatpush.bf16.msra.mxu0 %v417
    %729 = vmatpush.bf16.msra.mxu0 %v413
    %730 = vmatpush.bf16.msra.mxu0 %v409
    %731 = vmatpush.bf16.msra.mxu0 %v405
    %732 = vmatpush.bf16.msra.mxu0 %v401
    %733 = vmatmul.bf16.gmra.mxu0 %v711
    %v734 = vpop.f32.mrf.mxu0
    %v735 = vadd.f32 0.0, %v734
    %v736 = vpop.f32.mrf.mxu0
    %737 = vdwg.mxu0
    %738 = vmatpush.bf16.msra.mxu0 %v430
    %739 = vmatpush.bf16.msra.mxu0 %v426
    %740 = vmatpush.bf16.msra.mxu0 %v422
    %741 = vmatpush.bf16.msra.mxu0 %v418
    %742 = vmatpush.bf16.msra.mxu0 %v414
    %743 = vmatpush.bf16.msra.mxu0 %v410
    %744 = vmatpush.bf16.msra.mxu0 %v406
    %745 = vmatpush.bf16.msra.mxu0 %v402
    %746 = vmatmul.bf16.gmra.mxu0 %v711
    %v747 = vpop.f32.mrf.mxu0
    %v748 = vadd.f32 0.0, %v747
    %v749 = vpop.f32.mrf.mxu0
    %750 = vdwg.mxu0
    %751 = vmatpush.bf16.msra.mxu0 %v431
    %752 = vmatpush.bf16.msra.mxu0 %v427
    %753 = vmatpush.bf16.msra.mxu0 %v423
    %754 = vmatpush.bf16.msra.mxu0 %v419
    %755 = vmatpush.bf16.msra.mxu0 %v415
    %756 = vmatpush.bf16.msra.mxu0 %v411
    %757 = vmatpush.bf16.msra.mxu0 %v407
    %758 = vmatpush.bf16.msra.mxu0 %v403
    %759 = vmatmul.bf16.gmra.mxu0 %v711
    %v760 = vpop.f32.mrf.mxu0
    %v761 = vadd.f32 0.0, %v760
    %v762 = vpop.f32.mrf.mxu0
    %763 = vdwg.mxu0
    %v764 = vadd.f32 %v707, %v722
    %v765 = vadd.f32 %v708, %v735
    %v766 = vadd.f32 %v709, %v748
    %v767 = vadd.f32 %v710, %v761
    %v768 = vxor.u32 %v764, 2147483648
    %v769 = vxor.u32 %v765, 2147483648
    %v770 = vxor.u32 %v766, 2147483648
    %v771 = vmul.f32 %v768, 1.442695
    %v772 = vpow.pop %v771
    %v773 = vmul.f32 %v769, 1.442695
    %v774 = vpow.pop %v773
    %v775 = vmul.f32 %v770, 1.442695
    %v776 = vpow.pop %v775
    %v777 = vadd.f32 %v772, 1.0
    %v778 = vadd.f32 %v774, 1.0
    %v779 = vadd.f32 %v776, 1.0
    %v780 = vrcp.pop %v777
    %v781 = vmul.f32 %v777, %v780
    %v782 = vsub.f32 1.0, %v781
    %v783 = vmul.f32 %v780, %v782
    %v784 = vadd.f32 %v780, %v783
    %vm785 = vweird.f32 %v777
    %vm786 = vweird.f32 %v780
    %vm787 = vmor %vm785, %vm786
    %v788 = vsel %vm787, %v780, %v784
    %v789 = vand.u32 2147483647, %v777
    %vm790 = vcmp.eq.f32.partialorder %v789, 8.507059e+37
    %v791 = vand.u32 %v777, 2147483648
    %v792 = vor.u32 1.1754944e-38, %v791
    %v793 = vsel %vm790, %v792, %v788
    %v794 = vmul.f32 1.0, %v793
    %v795 = vrcp.pop %v778
    %v796 = vmul.f32 %v778, %v795
    %v797 = vsub.f32 1.0, %v796
    %v798 = vmul.f32 %v795, %v797
    %v799 = vadd.f32 %v795, %v798
    %vm800 = vweird.f32 %v778
    %vm801 = vweird.f32 %v795
    %vm802 = vmor %vm800, %vm801
    %v803 = vsel %vm802, %v795, %v799
    %v804 = vand.u32 2147483647, %v778
    %vm805 = vcmp.eq.f32.partialorder %v804, 8.507059e+37
    %v806 = vand.u32 %v778, 2147483648
    %v807 = vor.u32 1.1754944e-38, %v806
    %v808 = vsel %vm805, %v807, %v803
    %v809 = vmul.f32 1.0, %v808
    %v810 = vrcp.pop %v779
    %v811 = vmul.f32 %v779, %v810
    %v812 = vsub.f32 1.0, %v811
    %v813 = vmul.f32 %v810, %v812
    %v814 = vadd.f32 %v810, %v813
    %vm815 = vweird.f32 %v779
    %vm816 = vweird.f32 %v810
    %vm817 = vmor %vm815, %vm816
    %v818 = vsel %vm817, %v810, %v814
    %v819 = vand.u32 2147483647, %v779
    %vm820 = vcmp.eq.f32.partialorder %v819, 8.507059e+37
    %v821 = vand.u32 %v779, 2147483648
    %v822 = vor.u32 1.1754944e-38, %v821
    %v823 = vsel %vm820, %v822, %v818
    %v824 = vmul.f32 1.0, %v823
    %v825 = vtanh.pop %v767
    %v826 = vmul.f32 %v809, %v704
    %v827 = vmul.f32 %v794, %v825
    %v828 = vadd.f32 %v826, %v827
    %v829 = vtanh.pop %v828
    %v830 = vmul.f32 %v824, %v829
    %v831 = vld [vmem:[#allocation2 + $0x60] sm:$0xff]
    %v832 = vld [vmem:[#allocation2 + $0x68] sm:$0xff]
    %v833 = vld [vmem:[#allocation2 + $0x70] sm:$0xff]
    %v834 = vld [vmem:[#allocation2 + $0x78] sm:$0xff]
    %v835 = vpack.c.bf16 %v830, %v830
    %836 = vmatpush.bf16.msra.mxu0 %v428
    %837 = vmatpush.bf16.msra.mxu0 %v424
    %838 = vmatpush.bf16.msra.mxu0 %v420
    %839 = vmatpush.bf16.msra.mxu0 %v416
    %840 = vmatpush.bf16.msra.mxu0 %v412
    %841 = vmatpush.bf16.msra.mxu0 %v408
    %842 = vmatpush.bf16.msra.mxu0 %v404
    %843 = vmatpush.bf16.msra.mxu0 %v400
    %844 = vmatmul.bf16.gmra.mxu0 %v835
    %v845 = vpop.f32.mrf.mxu0
    %v846 = vadd.f32 0.0, %v845
    %v847 = vpop.f32.mrf.mxu0
    %848 = vdwg.mxu0
    %849 = vmatpush.bf16.msra.mxu0 %v429
    %850 = vmatpush.bf16.msra.mxu0 %v425
    %851 = vmatpush.bf16.msra.mxu0 %v421
    %852 = vmatpush.bf16.msra.mxu0 %v417
    %853 = vmatpush.bf16.msra.mxu0 %v413
    %854 = vmatpush.bf16.msra.mxu0 %v409
    %855 = vmatpush.bf16.msra.mxu0 %v405
    %856 = vmatpush.bf16.msra.mxu0 %v401
    %857 = vmatmul.bf16.gmra.mxu0 %v835
    %v858 = vpop.f32.mrf.mxu0
    %v859 = vadd.f32 0.0, %v858
    %v860 = vpop.f32.mrf.mxu0
    %861 = vdwg.mxu0
    %862 = vmatpush.bf16.msra.mxu0 %v430
    %863 = vmatpush.bf16.msra.mxu0 %v426
    %864 = vmatpush.bf16.msra.mxu0 %v422
    %865 = vmatpush.bf16.msra.mxu0 %v418
    %866 = vmatpush.bf16.msra.mxu0 %v414
    %867 = vmatpush.bf16.msra.mxu0 %v410
    %868 = vmatpush.bf16.msra.mxu0 %v406
    %869 = vmatpush.bf16.msra.mxu0 %v402
    %870 = vmatmul.bf16.gmra.mxu0 %v835
    %v871 = vpop.f32.mrf.mxu0
    %v872 = vadd.f32 0.0, %v871
    %v873 = vpop.f32.mrf.mxu0
    %874 = vdwg.mxu0
    %875 = vmatpush.bf16.msra.mxu0 %v431
    %876 = vmatpush.bf16.msra.mxu0 %v427
    %877 = vmatpush.bf16.msra.mxu0 %v423
    %878 = vmatpush.bf16.msra.mxu0 %v419
    %879 = vmatpush.bf16.msra.mxu0 %v415
    %880 = vmatpush.bf16.msra.mxu0 %v411
    %881 = vmatpush.bf16.msra.mxu0 %v407
    %882 = vmatpush.bf16.msra.mxu0 %v403
    %883 = vmatmul.bf16.gmra.mxu0 %v835
    %v884 = vpop.f32.mrf.mxu0
    %v885 = vadd.f32 0.0, %v884
    %v886 = vpop.f32.mrf.mxu0
    %887 = vdwg.mxu0
    %v888 = vadd.f32 %v831, %v846
    %v889 = vadd.f32 %v832, %v859
    %v890 = vadd.f32 %v833, %v872
    %v891 = vadd.f32 %v834, %v885
    %v892 = vxor.u32 %v888, 2147483648
    %v893 = vxor.u32 %v889, 2147483648
    %v894 = vxor.u32 %v890, 2147483648
    %v895 = vmul.f32 %v892, 1.442695
    %v896 = vpow.pop %v895
    %v897 = vmul.f32 %v893, 1.442695
    %v898 = vpow.pop %v897
    %v899 = vmul.f32 %v894, 1.442695
    %v900 = vpow.pop %v899
    %v901 = vadd.f32 %v896, 1.0
    %v902 = vadd.f32 %v898, 1.0
    %v903 = vadd.f32 %v900, 1.0
    %v904 = vrcp.pop %v901
    %v905 = vmul.f32 %v901, %v904
    %v906 = vsub.f32 1.0, %v905
    %v907 = vmul.f32 %v904, %v906
    %v908 = vadd.f32 %v904, %v907
    %vm909 = vweird.f32 %v901
    %vm910 = vweird.f32 %v904
    %vm911 = vmor %vm909, %vm910
    %v912 = vsel %vm911, %v904, %v908
    %v913 = vand.u32 2147483647, %v901
    %vm914 = vcmp.eq.f32.partialorder %v913, 8.507059e+37
    %v915 = vand.u32 %v901, 2147483648
    %v916 = vor.u32 1.1754944e-38, %v915
    %v917 = vsel %vm914, %v916, %v912
    %v918 = vmul.f32 1.0, %v917
    %v919 = vrcp.pop %v902
    %v920 = vmul.f32 %v902, %v919
    %v921 = vsub.f32 1.0, %v920
    %v922 = vmul.f32 %v919, %v921
    %v923 = vadd.f32 %v919, %v922
    %vm924 = vweird.f32 %v902
    %vm925 = vweird.f32 %v919
    %vm926 = vmor %vm924, %vm925
    %v927 = vsel %vm926, %v919, %v923
    %v928 = vand.u32 2147483647, %v902
    %vm929 = vcmp.eq.f32.partialorder %v928, 8.507059e+37
    %v930 = vand.u32 %v902, 2147483648
    %v931 = vor.u32 1.1754944e-38, %v930
    %v932 = vsel %vm929, %v931, %v927
    %v933 = vmul.f32 1.0, %v932
    %v934 = vrcp.pop %v903
    %v935 = vmul.f32 %v903, %v934
    %v936 = vsub.f32 1.0, %v935
    %v937 = vmul.f32 %v934, %v936
    %v938 = vadd.f32 %v934, %v937
    %vm939 = vweird.f32 %v903
    %vm940 = vweird.f32 %v934
    %vm941 = vmor %vm939, %vm940
    %v942 = vsel %vm941, %v934, %v938
    %v943 = vand.u32 2147483647, %v903
    %vm944 = vcmp.eq.f32.partialorder %v943, 8.507059e+37
    %v945 = vand.u32 %v903, 2147483648
    %v946 = vor.u32 1.1754944e-38, %v945
    %v947 = vsel %vm944, %v946, %v942
    %v948 = vmul.f32 1.0, %v947
    %v949 = vtanh.pop %v891
    %v950 = vmul.f32 %v933, %v828
    %v951 = vmul.f32 %v918, %v949
    %v952 = vadd.f32 %v950, %v951
    %v953 = vtanh.pop %v952
    %v954 = vmul.f32 %v948, %v953
    %v955 = vld [vmem:[#allocation2 + $0x80] sm:$0xff]
    %v956 = vld [vmem:[#allocation2 + $0x88] sm:$0xff]
    %v957 = vld [vmem:[#allocation2 + $0x90] sm:$0xff]
    %v958 = vld [vmem:[#allocation2 + $0x98] sm:$0xff]
    %v959 = vpack.c.bf16 %v954, %v954
    %960 = vmatpush.bf16.msra.mxu0 %v428
    %961 = vmatpush.bf16.msra.mxu0 %v424
    %962 = vmatpush.bf16.msra.mxu0 %v420
    %963 = vmatpush.bf16.msra.mxu0 %v416
    %964 = vmatpush.bf16.msra.mxu0 %v412
    %965 = vmatpush.bf16.msra.mxu0 %v408
    %966 = vmatpush.bf16.msra.mxu0 %v404
    %967 = vmatpush.bf16.msra.mxu0 %v400
    %968 = vmatmul.bf16.gmra.mxu0 %v959
    %v969 = vpop.f32.mrf.mxu0
    %v970 = vadd.f32 0.0, %v969
    %v971 = vpop.f32.mrf.mxu0
    %972 = vdwg.mxu0
    %973 = vmatpush.bf16.msra.mxu0 %v429
    %974 = vmatpush.bf16.msra.mxu0 %v425
    %975 = vmatpush.bf16.msra.mxu0 %v421
    %976 = vmatpush.bf16.msra.mxu0 %v417
    %977 = vmatpush.bf16.msra.mxu0 %v413
    %978 = vmatpush.bf16.msra.mxu0 %v409
    %979 = vmatpush.bf16.msra.mxu0 %v405
    %980 = vmatpush.bf16.msra.mxu0 %v401
    %981 = vmatmul.bf16.gmra.mxu0 %v959
    %v982 = vpop.f32.mrf.mxu0
    %v983 = vadd.f32 0.0, %v982
    %v984 = vpop.f32.mrf.mxu0
    %985 = vdwg.mxu0
    %986 = vmatpush.bf16.msra.mxu0 %v430
    %987 = vmatpush.bf16.msra.mxu0 %v426
    %988 = vmatpush.bf16.msra.mxu0 %v422
    %989 = vmatpush.bf16.msra.mxu0 %v418
    %990 = vmatpush.bf16.msra.mxu0 %v414
    %991 = vmatpush.bf16.msra.mxu0 %v410
    %992 = vmatpush.bf16.msra.mxu0 %v406
    %993 = vmatpush.bf16.msra.mxu0 %v402
    %994 = vmatmul.bf16.gmra.mxu0 %v959
    %v995 = vpop.f32.mrf.mxu0
    %v996 = vadd.f32 0.0, %v995
    %v997 = vpop.f32.mrf.mxu0
    %998 = vdwg.mxu0
    %999 = vmatpush.bf16.msra.mxu0 %v431
    %1000 = vmatpush.bf16.msra.mxu0 %v427
    %1001 = vmatpush.bf16.msra.mxu0 %v423
    %1002 = vmatpush.bf16.msra.mxu0 %v419
    %1003 = vmatpush.bf16.msra.mxu0 %v415
    %1004 = vmatpush.bf16.msra.mxu0 %v411
    %1005 = vmatpush.bf16.msra.mxu0 %v407
    %1006 = vmatpush.bf16.msra.mxu0 %v403
    %1007 = vmatmul.bf16.gmra.mxu0 %v959
    %v1008 = vpop.f32.mrf.mxu0
    %v1009 = vadd.f32 0.0, %v1008
    %v1010 = vpop.f32.mrf.mxu0
    %1011 = vdwg.mxu0
    %v1012 = vadd.f32 %v955, %v970
    %v1013 = vadd.f32 %v956, %v983
    %v1014 = vadd.f32 %v957, %v996
    %v1015 = vadd.f32 %v958, %v1009
    %v1016 = vxor.u32 %v1012, 2147483648
    %v1017 = vxor.u32 %v1013, 2147483648
    %v1018 = vxor.u32 %v1014, 2147483648
    %v1019 = vmul.f32 %v1016, 1.442695
    %v1020 = vpow.pop %v1019
    %v1021 = vmul.f32 %v1017, 1.442695
    %v1022 = vpow.pop %v1021
    %v1023 = vmul.f32 %v1018, 1.442695
    %v1024 = vpow.pop %v1023
    %v1025 = vadd.f32 %v1020, 1.0
    %v1026 = vadd.f32 %v1022, 1.0
    %v1027 = vadd.f32 %v1024, 1.0
    %v1028 = vrcp.pop %v1025
    %v1029 = vmul.f32 %v1025, %v1028
    %v1030 = vsub.f32 1.0, %v1029
    %v1031 = vmul.f32 %v1028, %v1030
    %v1032 = vadd.f32 %v1028, %v1031
    %vm1033 = vweird.f32 %v1025
    %vm1034 = vweird.f32 %v1028
    %vm1035 = vmor %vm1033, %vm1034
    %v1036 = vsel %vm1035, %v1028, %v1032
    %v1037 = vand.u32 2147483647, %v1025
    %vm1038 = vcmp.eq.f32.partialorder %v1037, 8.507059e+37
    %v1039 = vand.u32 %v1025, 2147483648
    %v1040 = vor.u32 1.1754944e-38, %v1039
    %v1041 = vsel %vm1038, %v1040, %v1036
    %v1042 = vmul.f32 1.0, %v1041
    %v1043 = vrcp.pop %v1026
    %v1044 = vmul.f32 %v1026, %v1043
    %v1045 = vsub.f32 1.0, %v1044
    %v1046 = vmul.f32 %v1043, %v1045
    %v1047 = vadd.f32 %v1043, %v1046
    %vm1048 = vweird.f32 %v1026
    %vm1049 = vweird.f32 %v1043
    %vm1050 = vmor %vm1048, %vm1049
    %v1051 = vsel %vm1050, %v1043, %v1047
    %v1052 = vand.u32 2147483647, %v1026
    %vm1053 = vcmp.eq.f32.partialorder %v1052, 8.507059e+37
    %v1054 = vand.u32 %v1026, 2147483648
    %v1055 = vor.u32 1.1754944e-38, %v1054
    %v1056 = vsel %vm1053, %v1055, %v1051
    %v1057 = vmul.f32 1.0, %v1056
    %v1058 = vrcp.pop %v1027
    %v1059 = vmul.f32 %v1027, %v1058
    %v1060 = vsub.f32 1.0, %v1059
    %v1061 = vmul.f32 %v1058, %v1060
    %v1062 = vadd.f32 %v1058, %v1061
    %vm1063 = vweird.f32 %v1027
    %vm1064 = vweird.f32 %v1058
    %vm1065 = vmor %vm1063, %vm1064
    %v1066 = vsel %vm1065, %v1058, %v1062
    %v1067 = vand.u32 2147483647, %v1027
    %vm1068 = vcmp.eq.f32.partialorder %v1067, 8.507059e+37
    %v1069 = vand.u32 %v1027, 2147483648
    %v1070 = vor.u32 1.1754944e-38, %v1069
    %v1071 = vsel %vm1068, %v1070, %v1066
    %v1072 = vmul.f32 1.0, %v1071
    %v1073 = vtanh.pop %v1015
    %v1074 = vmul.f32 %v1057, %v952
    %v1075 = vmul.f32 %v1042, %v1073
    %v1076 = vadd.f32 %v1074, %v1075
    %v1077 = vtanh.pop %v1076
    %v1078 = vmul.f32 %v1072, %v1077
    %v1079 = vld [vmem:[#allocation2 + $0xa0] sm:$0xff]
    %v1080 = vld [vmem:[#allocation2 + $0xa8] sm:$0xff]
    %v1081 = vld [vmem:[#allocation2 + $0xb0] sm:$0xff]
    %v1082 = vld [vmem:[#allocation2 + $0xb8] sm:$0xff]
    %v1083 = vpack.c.bf16 %v1078, %v1078
    %1084 = vmatpush.bf16.msra.mxu0 %v428
    %1085 = vmatpush.bf16.msra.mxu0 %v424
    %1086 = vmatpush.bf16.msra.mxu0 %v420
    %1087 = vmatpush.bf16.msra.mxu0 %v416
    %1088 = vmatpush.bf16.msra.mxu0 %v412
    %1089 = vmatpush.bf16.msra.mxu0 %v408
    %1090 = vmatpush.bf16.msra.mxu0 %v404
    %1091 = vmatpush.bf16.msra.mxu0 %v400
    %1092 = vmatmul.bf16.gmra.mxu0 %v1083
    %v1093 = vpop.f32.mrf.mxu0
    %v1094 = vadd.f32 0.0, %v1093
    %v1095 = vpop.f32.mrf.mxu0
    %1096 = vdwg.mxu0
    %1097 = vmatpush.bf16.msra.mxu0 %v429
    %1098 = vmatpush.bf16.msra.mxu0 %v425
    %1099 = vmatpush.bf16.msra.mxu0 %v421
    %1100 = vmatpush.bf16.msra.mxu0 %v417
    %1101 = vmatpush.bf16.msra.mxu0 %v413
    %1102 = vmatpush.bf16.msra.mxu0 %v409
    %1103 = vmatpush.bf16.msra.mxu0 %v405
    %1104 = vmatpush.bf16.msra.mxu0 %v401
    %1105 = vmatmul.bf16.gmra.mxu0 %v1083
    %v1106 = vpop.f32.mrf.mxu0
    %v1107 = vadd.f32 0.0, %v1106
    %v1108 = vpop.f32.mrf.mxu0
    %1109 = vdwg.mxu0
    %1110 = vmatpush.bf16.msra.mxu0 %v430
    %1111 = vmatpush.bf16.msra.mxu0 %v426
    %1112 = vmatpush.bf16.msra.mxu0 %v422
    %1113 = vmatpush.bf16.msra.mxu0 %v418
    %1114 = vmatpush.bf16.msra.mxu0 %v414
    %1115 = vmatpush.bf16.msra.mxu0 %v410
    %1116 = vmatpush.bf16.msra.mxu0 %v406
    %1117 = vmatpush.bf16.msra.mxu0 %v402
    %1118 = vmatmul.bf16.gmra.mxu0 %v1083
    %v1119 = vpop.f32.mrf.mxu0
    %v1120 = vadd.f32 0.0, %v1119
    %v1121 = vpop.f32.mrf.mxu0
    %1122 = vdwg.mxu0
    %1123 = vmatpush.bf16.msra.mxu0 %v431
    %1124 = vmatpush.bf16.msra.mxu0 %v427
    %1125 = vmatpush.bf16.msra.mxu0 %v423
    %1126 = vmatpush.bf16.msra.mxu0 %v419
    %1127 = vmatpush.bf16.msra.mxu0 %v415
    %1128 = vmatpush.bf16.msra.mxu0 %v411
    %1129 = vmatpush.bf16.msra.mxu0 %v407
    %1130 = vmatpush.bf16.msra.mxu0 %v403
    %1131 = vmatmul.bf16.gmra.mxu0 %v1083
    %v1132 = vpop.f32.mrf.mxu0
    %v1133 = vadd.f32 0.0, %v1132
    %v1134 = vpop.f32.mrf.mxu0
    %1135 = vdwg.mxu0
    %v1136 = vadd.f32 %v1079, %v1094
    %v1137 = vadd.f32 %v1080, %v1107
    %v1138 = vadd.f32 %v1081, %v1120
    %v1139 = vadd.f32 %v1082, %v1133
    %v1140 = vxor.u32 %v1136, 2147483648
    %v1141 = vxor.u32 %v1137, 2147483648
    %v1142 = vxor.u32 %v1138, 2147483648
    %v1143 = vmul.f32 %v1140, 1.442695
    %v1144 = vpow.pop %v1143
    %v1145 = vmul.f32 %v1141, 1.442695
    %v1146 = vpow.pop %v1145
    %v1147 = vmul.f32 %v1142, 1.442695
    %v1148 = vpow.pop %v1147
    %v1149 = vadd.f32 %v1144, 1.0
    %v1150 = vadd.f32 %v1146, 1.0
    %v1151 = vadd.f32 %v1148, 1.0
    %v1152 = vrcp.pop %v1149
    %v1153 = vmul.f32 %v1149, %v1152
    %v1154 = vsub.f32 1.0, %v1153
    %v1155 = vmul.f32 %v1152, %v1154
    %v1156 = vadd.f32 %v1152, %v1155
    %vm1157 = vweird.f32 %v1149
    %vm1158 = vweird.f32 %v1152
    %vm1159 = vmor %vm1157, %vm1158
    %v1160 = vsel %vm1159, %v1152, %v1156
    %v1161 = vand.u32 2147483647, %v1149
    %vm1162 = vcmp.eq.f32.partialorder %v1161, 8.507059e+37
    %v1163 = vand.u32 %v1149, 2147483648
    %v1164 = vor.u32 1.1754944e-38, %v1163
    %v1165 = vsel %vm1162, %v1164, %v1160
    %v1166 = vmul.f32 1.0, %v1165
    %v1167 = vrcp.pop %v1150
    %v1168 = vmul.f32 %v1150, %v1167
    %v1169 = vsub.f32 1.0, %v1168
    %v1170 = vmul.f32 %v1167, %v1169
    %v1171 = vadd.f32 %v1167, %v1170
    %vm1172 = vweird.f32 %v1150
    %vm1173 = vweird.f32 %v1167
    %vm1174 = vmor %vm1172, %vm1173
    %v1175 = vsel %vm1174, %v1167, %v1171
    %v1176 = vand.u32 2147483647, %v1150
    %vm1177 = vcmp.eq.f32.partialorder %v1176, 8.507059e+37
    %v1178 = vand.u32 %v1150, 2147483648
    %v1179 = vor.u32 1.1754944e-38, %v1178
    %v1180 = vsel %vm1177, %v1179, %v1175
    %v1181 = vmul.f32 1.0, %v1180
    %v1182 = vrcp.pop %v1151
    %v1183 = vmul.f32 %v1151, %v1182
    %v1184 = vsub.f32 1.0, %v1183
    %v1185 = vmul.f32 %v1182, %v1184
    %v1186 = vadd.f32 %v1182, %v1185
    %vm1187 = vweird.f32 %v1151
    %vm1188 = vweird.f32 %v1182
    %vm1189 = vmor %vm1187, %vm1188
    %v1190 = vsel %vm1189, %v1182, %v1186
    %v1191 = vand.u32 2147483647, %v1151
    %vm1192 = vcmp.eq.f32.partialorder %v1191, 8.507059e+37
    %v1193 = vand.u32 %v1151, 2147483648
    %v1194 = vor.u32 1.1754944e-38, %v1193
    %v1195 = vsel %vm1192, %v1194, %v1190
    %v1196 = vmul.f32 1.0, %v1195
    %v1197 = vtanh.pop %v1139
    %v1198 = vmul.f32 %v1181, %v1076
    %v1199 = vmul.f32 %v1166, %v1197
    %v1200 = vadd.f32 %v1198, %v1199
    %v1201 = vtanh.pop %v1200
    %v1202 = vmul.f32 %v1196, %v1201
    %v1203 = vld [vmem:[#allocation2 + $0xc0] sm:$0xff]
    %v1204 = vld [vmem:[#allocation2 + $0xc8] sm:$0xff]
    %v1205 = vld [vmem:[#allocation2 + $0xd0] sm:$0xff]
    %v1206 = vld [vmem:[#allocation2 + $0xd8] sm:$0xff]
    %v1207 = vpack.c.bf16 %v1202, %v1202
    %1208 = vmatpush.bf16.msra.mxu0 %v428
    %1209 = vmatpush.bf16.msra.mxu0 %v424
    %1210 = vmatpush.bf16.msra.mxu0 %v420
    %1211 = vmatpush.bf16.msra.mxu0 %v416
    %1212 = vmatpush.bf16.msra.mxu0 %v412
    %1213 = vmatpush.bf16.msra.mxu0 %v408
    %1214 = vmatpush.bf16.msra.mxu0 %v404
    %1215 = vmatpush.bf16.msra.mxu0 %v400
    %1216 = vmatmul.bf16.gmra.mxu0 %v1207
    %v1217 = vpop.f32.mrf.mxu0
    %v1218 = vadd.f32 0.0, %v1217
    %v1219 = vpop.f32.mrf.mxu0
    %1220 = vdwg.mxu0
    %1221 = vmatpush.bf16.msra.mxu0 %v429
    %1222 = vmatpush.bf16.msra.mxu0 %v425
    %1223 = vmatpush.bf16.msra.mxu0 %v421
    %1224 = vmatpush.bf16.msra.mxu0 %v417
    %1225 = vmatpush.bf16.msra.mxu0 %v413
    %1226 = vmatpush.bf16.msra.mxu0 %v409
    %1227 = vmatpush.bf16.msra.mxu0 %v405
    %1228 = vmatpush.bf16.msra.mxu0 %v401
    %1229 = vmatmul.bf16.gmra.mxu0 %v1207
    %v1230 = vpop.f32.mrf.mxu0
    %v1231 = vadd.f32 0.0, %v1230
    %v1232 = vpop.f32.mrf.mxu0
    %1233 = vdwg.mxu0
    %1234 = vmatpush.bf16.msra.mxu0 %v430
    %1235 = vmatpush.bf16.msra.mxu0 %v426
    %1236 = vmatpush.bf16.msra.mxu0 %v422
    %1237 = vmatpush.bf16.msra.mxu0 %v418
    %1238 = vmatpush.bf16.msra.mxu0 %v414
    %1239 = vmatpush.bf16.msra.mxu0 %v410
    %1240 = vmatpush.bf16.msra.mxu0 %v406
    %1241 = vmatpush.bf16.msra.mxu0 %v402
    %1242 = vmatmul.bf16.gmra.mxu0 %v1207
    %v1243 = vpop.f32.mrf.mxu0
    %v1244 = vadd.f32 0.0, %v1243
    %v1245 = vpop.f32.mrf.mxu0
    %1246 = vdwg.mxu0
    %1247 = vmatpush.bf16.msra.mxu0 %v431
    %1248 = vmatpush.bf16.msra.mxu0 %v427
    %1249 = vmatpush.bf16.msra.mxu0 %v423
    %1250 = vmatpush.bf16.msra.mxu0 %v419
    %1251 = vmatpush.bf16.msra.mxu0 %v415
    %1252 = vmatpush.bf16.msra.mxu0 %v411
    %1253 = vmatpush.bf16.msra.mxu0 %v407
    %1254 = vmatpush.bf16.msra.mxu0 %v403
    %1255 = vmatmul.bf16.gmra.mxu0 %v1207
    %v1256 = vpop.f32.mrf.mxu0
    %v1257 = vadd.f32 0.0, %v1256
    %v1258 = vpop.f32.mrf.mxu0
    %1259 = vdwg.mxu0
    %v1260 = vadd.f32 %v1203, %v1218
    %v1261 = vadd.f32 %v1204, %v1231
    %v1262 = vadd.f32 %v1205, %v1244
    %v1263 = vadd.f32 %v1206, %v1257
    %v1264 = vxor.u32 %v1260, 2147483648
    %v1265 = vxor.u32 %v1261, 2147483648
    %v1266 = vxor.u32 %v1262, 2147483648
    %v1267 = vmul.f32 %v1264, 1.442695
    %v1268 = vpow.pop %v1267
    %v1269 = vmul.f32 %v1265, 1.442695
    %v1270 = vpow.pop %v1269
    %v1271 = vmul.f32 %v1266, 1.442695
    %v1272 = vpow.pop %v1271
    %v1273 = vadd.f32 %v1268, 1.0
    %v1274 = vadd.f32 %v1270, 1.0
    %v1275 = vadd.f32 %v1272, 1.0
    %v1276 = vrcp.pop %v1273
    %v1277 = vmul.f32 %v1273, %v1276
    %v1278 = vsub.f32 1.0, %v1277
    %v1279 = vmul.f32 %v1276, %v1278
    %v1280 = vadd.f32 %v1276, %v1279
    %vm1281 = vweird.f32 %v1273
    %vm1282 = vweird.f32 %v1276
    %vm1283 = vmor %vm1281, %vm1282
    %v1284 = vsel %vm1283, %v1276, %v1280
    %v1285 = vand.u32 2147483647, %v1273
    %vm1286 = vcmp.eq.f32.partialorder %v1285, 8.507059e+37
    %v1287 = vand.u32 %v1273, 2147483648
    %v1288 = vor.u32 1.1754944e-38, %v1287
    %v1289 = vsel %vm1286, %v1288, %v1284
    %v1290 = vmul.f32 1.0, %v1289
    %v1291 = vrcp.pop %v1274
    %v1292 = vmul.f32 %v1274, %v1291
    %v1293 = vsub.f32 1.0, %v1292
    %v1294 = vmul.f32 %v1291, %v1293
    %v1295 = vadd.f32 %v1291, %v1294
    %vm1296 = vweird.f32 %v1274
    %vm1297 = vweird.f32 %v1291
    %vm1298 = vmor %vm1296, %vm1297
    %v1299 = vsel %vm1298, %v1291, %v1295
    %v1300 = vand.u32 2147483647, %v1274
    %vm1301 = vcmp.eq.f32.partialorder %v1300, 8.507059e+37
    %v1302 = vand.u32 %v1274, 2147483648
    %v1303 = vor.u32 1.1754944e-38, %v1302
    %v1304 = vsel %vm1301, %v1303, %v1299
    %v1305 = vmul.f32 1.0, %v1304
    %v1306 = vrcp.pop %v1275
    %v1307 = vmul.f32 %v1275, %v1306
    %v1308 = vsub.f32 1.0, %v1307
    %v1309 = vmul.f32 %v1306, %v1308
    %v1310 = vadd.f32 %v1306, %v1309
    %vm1311 = vweird.f32 %v1275
    %vm1312 = vweird.f32 %v1306
    %vm1313 = vmor %vm1311, %vm1312
    %v1314 = vsel %vm1313, %v1306, %v1310
    %v1315 = vand.u32 2147483647, %v1275
    %vm1316 = vcmp.eq.f32.partialorder %v1315, 8.507059e+37
    %v1317 = vand.u32 %v1275, 2147483648
    %v1318 = vor.u32 1.1754944e-38, %v1317
    %v1319 = vsel %vm1316, %v1318, %v1314
    %v1320 = vmul.f32 1.0, %v1319
    %v1321 = vtanh.pop %v1263
    %v1322 = vmul.f32 %v1305, %v1200
    %v1323 = vmul.f32 %v1290, %v1321
    %v1324 = vadd.f32 %v1322, %v1323
    %v1325 = vtanh.pop %v1324
    %v1326 = vmul.f32 %v1320, %v1325
    %v1327 = vld [vmem:[#allocation2 + $0xe0] sm:$0xff]
    %v1328 = vld [vmem:[#allocation2 + $0xe8] sm:$0xff]
    %v1329 = vld [vmem:[#allocation2 + $0xf0] sm:$0xff]
    %v1330 = vld [vmem:[#allocation2 + $0xf8] sm:$0xff]
    %v1331 = vpack.c.bf16 %v1326, %v1326
    %1332 = vmatpush.bf16.msra.mxu0 %v428
    %1333 = vmatpush.bf16.msra.mxu0 %v424
    %1334 = vmatpush.bf16.msra.mxu0 %v420
    %1335 = vmatpush.bf16.msra.mxu0 %v416
    %1336 = vmatpush.bf16.msra.mxu0 %v412
    %1337 = vmatpush.bf16.msra.mxu0 %v408
    %1338 = vmatpush.bf16.msra.mxu0 %v404
    %1339 = vmatpush.bf16.msra.mxu0 %v400
    %1340 = vmatmul.bf16.gmra.mxu0 %v1331
    %v1341 = vpop.f32.mrf.mxu0
    %v1342 = vadd.f32 0.0, %v1341
    %v1343 = vpop.f32.mrf.mxu0
    %1344 = vdwg.mxu0
    %1345 = vmatpush.bf16.msra.mxu0 %v429
    %1346 = vmatpush.bf16.msra.mxu0 %v425
    %1347 = vmatpush.bf16.msra.mxu0 %v421
    %1348 = vmatpush.bf16.msra.mxu0 %v417
    %1349 = vmatpush.bf16.msra.mxu0 %v413
    %1350 = vmatpush.bf16.msra.mxu0 %v409
    %1351 = vmatpush.bf16.msra.mxu0 %v405
    %1352 = vmatpush.bf16.msra.mxu0 %v401
    %1353 = vmatmul.bf16.gmra.mxu0 %v1331
    %v1354 = vpop.f32.mrf.mxu0
    %v1355 = vadd.f32 0.0, %v1354
    %v1356 = vpop.f32.mrf.mxu0
    %1357 = vdwg.mxu0
    %1358 = vmatpush.bf16.msra.mxu0 %v430
    %1359 = vmatpush.bf16.msra.mxu0 %v426
    %1360 = vmatpush.bf16.msra.mxu0 %v422
    %1361 = vmatpush.bf16.msra.mxu0 %v418
    %1362 = vmatpush.bf16.msra.mxu0 %v414
    %1363 = vmatpush.bf16.msra.mxu0 %v410
    %1364 = vmatpush.bf16.msra.mxu0 %v406
    %1365 = vmatpush.bf16.msra.mxu0 %v402
    %1366 = vmatmul.bf16.gmra.mxu0 %v1331
    %v1367 = vpop.f32.mrf.mxu0
    %v1368 = vadd.f32 0.0, %v1367
    %v1369 = vpop.f32.mrf.mxu0
    %1370 = vdwg.mxu0
    %1371 = vmatpush.bf16.msra.mxu0 %v431
    %1372 = vmatpush.bf16.msra.mxu0 %v427
    %1373 = vmatpush.bf16.msra.mxu0 %v423
    %1374 = vmatpush.bf16.msra.mxu0 %v419
    %1375 = vmatpush.bf16.msra.mxu0 %v415
    %1376 = vmatpush.bf16.msra.mxu0 %v411
    %1377 = vmatpush.bf16.msra.mxu0 %v407
    %1378 = vmatpush.bf16.msra.mxu0 %v403
    %1379 = vmatmul.bf16.gmra.mxu0 %v1331
    %v1380 = vpop.f32.mrf.mxu0
    %v1381 = vadd.f32 0.0, %v1380
    %v1382 = vpop.f32.mrf.mxu0
    %1383 = vdwg.mxu0
    %v1384 = vadd.f32 %v1327, %v1342
    %v1385 = vadd.f32 %v1328, %v1355
    %v1386 = vadd.f32 %v1329, %v1368
    %v1387 = vadd.f32 %v1330, %v1381
    %v1388 = vxor.u32 %v1384, 2147483648
    %v1389 = vxor.u32 %v1385, 2147483648
    %v1390 = vxor.u32 %v1386, 2147483648
    %v1391 = vmul.f32 %v1388, 1.442695
    %v1392 = vpow.pop %v1391
    %v1393 = vmul.f32 %v1389, 1.442695
    %v1394 = vpow.pop %v1393
    %v1395 = vmul.f32 %v1390, 1.442695
    %v1396 = vpow.pop %v1395
    %v1397 = vadd.f32 %v1392, 1.0
    %v1398 = vadd.f32 %v1394, 1.0
    %v1399 = vadd.f32 %v1396, 1.0
    %v1400 = vrcp.pop %v1397
    %v1401 = vmul.f32 %v1397, %v1400
    %v1402 = vsub.f32 1.0, %v1401
    %v1403 = vmul.f32 %v1400, %v1402
    %v1404 = vadd.f32 %v1400, %v1403
    %vm1405 = vweird.f32 %v1397
    %vm1406 = vweird.f32 %v1400
    %vm1407 = vmor %vm1405, %vm1406
    %v1408 = vsel %vm1407, %v1400, %v1404
    %v1409 = vand.u32 2147483647, %v1397
    %vm1410 = vcmp.eq.f32.partialorder %v1409, 8.507059e+37
    %v1411 = vand.u32 %v1397, 2147483648
    %v1412 = vor.u32 1.1754944e-38, %v1411
    %v1413 = vsel %vm1410, %v1412, %v1408
    %v1414 = vmul.f32 1.0, %v1413
    %v1415 = vrcp.pop %v1398
    %v1416 = vmul.f32 %v1398, %v1415
    %v1417 = vsub.f32 1.0, %v1416
    %v1418 = vmul.f32 %v1415, %v1417
    %v1419 = vadd.f32 %v1415, %v1418
    %vm1420 = vweird.f32 %v1398
    %vm1421 = vweird.f32 %v1415
    %vm1422 = vmor %vm1420, %vm1421
    %v1423 = vsel %vm1422, %v1415, %v1419
    %v1424 = vand.u32 2147483647, %v1398
    %vm1425 = vcmp.eq.f32.partialorder %v1424, 8.507059e+37
    %v1426 = vand.u32 %v1398, 2147483648
    %v1427 = vor.u32 1.1754944e-38, %v1426
    %v1428 = vsel %vm1425, %v1427, %v1423
    %v1429 = vmul.f32 1.0, %v1428
    %v1430 = vrcp.pop %v1399
    %v1431 = vmul.f32 %v1399, %v1430
    %v1432 = vsub.f32 1.0, %v1431
    %v1433 = vmul.f32 %v1430, %v1432
    %v1434 = vadd.f32 %v1430, %v1433
    %vm1435 = vweird.f32 %v1399
    %vm1436 = vweird.f32 %v1430
    %vm1437 = vmor %vm1435, %vm1436
    %v1438 = vsel %vm1437, %v1430, %v1434
    %v1439 = vand.u32 2147483647, %v1399
    %vm1440 = vcmp.eq.f32.partialorder %v1439, 8.507059e+37
    %v1441 = vand.u32 %v1399, 2147483648
    %v1442 = vor.u32 1.1754944e-38, %v1441
    %v1443 = vsel %vm1440, %v1442, %v1438
    %v1444 = vmul.f32 1.0, %v1443
    %v1445 = vtanh.pop %v1387
    %v1446 = vmul.f32 %v1429, %v1324
    %v1447 = vmul.f32 %v1414, %v1445
    %v1448 = vadd.f32 %v1446, %v1447
    %v1449 = vtanh.pop %v1448
    %v1450 = vmul.f32 %v1444, %v1449
    %v1451 = vpack.c.bf16 %v1450, %v1450
    %v1452 = vld [vmem:[%s4] sm:$0xf]
    %v1453 = vld [vmem:[%s4 + $0x4] sm:$0xf]
    %v1454 = vld [vmem:[%s4 + $0x8] sm:$0xf]
    %v1455 = vld [vmem:[%s4 + $0xc] sm:$0xf]
    %v1456 = vld [vmem:[%s4 + $0x10] sm:$0xf]
    %v1457 = vld [vmem:[%s4 + $0x14] sm:$0xf]
    %v1458 = vld [vmem:[%s4 + $0x18] sm:$0xf]
    %v1459 = vld [vmem:[%s4 + $0x1c] sm:$0xf]
    %v1460 = vld [vmem:[%s4 + $0x20] sm:$0xf]
    %v1461 = vld [vmem:[%s4 + $0x24] sm:$0xf]
    %v1462 = vld [vmem:[%s4 + $0x28] sm:$0xf]
    %v1463 = vld [vmem:[%s4 + $0x2c] sm:$0xf]
    %v1464 = vld [vmem:[%s4 + $0x30] sm:$0xf]
    %v1465 = vld [vmem:[%s4 + $0x34] sm:$0xf]
    %v1466 = vld [vmem:[%s4 + $0x38] sm:$0xf]
    %v1467 = vld [vmem:[%s4 + $0x3c] sm:$0xf]
    %v1468 = vld [vmem:[%s5] sm:$0x1]
    %v1470 = vperm.slane %v1468, 0
    %v1488 = vunpack.c.l.b16 %v1452
    %v1489 = vunpack.c.l.b16 %v1453
    %v1490 = vunpack.c.l.b16 %v1454
    %v1491 = vunpack.c.l.b16 %v1455
    %v1492 = vunpack.c.l.b16 %v1456
    %v1493 = vunpack.c.l.b16 %v1457
    %v1494 = vunpack.c.l.b16 %v1458
    %v1495 = vunpack.c.l.b16 %v1459
    %v1496 = vunpack.c.l.b16 %v1460
    %v1497 = vunpack.c.l.b16 %v1461
    %v1498 = vunpack.c.l.b16 %v1462
    %v1499 = vunpack.c.l.b16 %v1463
    %v1500 = vunpack.c.l.b16 %v1464
    %v1501 = vunpack.c.l.b16 %v1465
    %v1502 = vunpack.c.l.b16 %v1466
    %v1503 = vunpack.c.l.b16 %v1467
    %v1504 = vpack.c.b16 %v1489, %v1488
    %v1505 = vpack.c.b16 %v1491, %v1490
    %v1506 = vpack.c.b16 %v1493, %v1492
    %v1507 = vpack.c.b16 %v1495, %v1494
    %v1508 = vpack.c.b16 %v1497, %v1496
    %v1509 = vpack.c.b16 %v1499, %v1498
    %v1510 = vpack.c.b16 %v1501, %v1500
    %v1511 = vpack.c.b16 %v1503, %v1502
    %1520 = vmatpush.bf16.msra.mxu0 %v1511
    %1521 = vmatpush.bf16.msra.mxu0 %v1510
    %1522 = vmatpush.bf16.msra.mxu0 %v1509
    %1523 = vmatpush.bf16.msra.mxu0 %v1508
    %1524 = vmatpush.bf16.msra.mxu0 %v1507
    %1525 = vmatpush.bf16.msra.mxu0 %v1506
    %1526 = vmatpush.bf16.msra.mxu0 %v1505
    %1527 = vmatpush.bf16.msra.mxu0 %v1504
    %1528 = vmatmul.bf16.gmra.mxu0 %v1451
    %v1529 = vpop.f32.mrf.mxu0
    %v1530 = vadd.f32 %v1470, %v1529
    %v1531 = vpop.f32.mrf.mxu0
    %1532 = vdwg.mxu0
    %vm1533 = vcmask 261120
    %1534 = vst.msk [vmem:[#allocation6] sm:$0xff] %vm1533, %v1530
    %v1535 = vadd.f32 %v1530, 1.0
    %v1536 = vlog2.pop %v1535
    %v1537 = vmul.f32 %v1536, 0.6931472
    %1539 = vrot.lane.b32.xlu0 %v1537, 96
    %v1540 = vpop.permute.xlu0 %1539
    %1542 = vst.msk [vmem:[#allocation7] sm:$0xff] %vm1533, %v1540
    // Predicated region
    $region30: #{tpu_custom_call.1} parent=1 // pred_check
      _
    $region31: #{tpu_custom_call.1} parent=1 // pred_check_branch
      %1544 = sbr.rel (0) target = $region33
    $region32: #{tpu_custom_call.1} parent=1 // pred_region
      %1546 = vsyncadd [#allocation5], 0
      %s1548 = sshll.u32 [#allocation6], 4
      %s1549 = int_to_ptr.vmem [resolvable:$true] %s1548
      %s1550 = sshll.u32 %s6, 4
      %s1551 = int_to_ptr.hbm [resolvable:$true] %s1550
      %1553 = dma.vmem_to_hbm [thread:$0]  %s1549, 128, %s1551, [#allocation5]
    $region33: #{tpu_custom_call.1} parent=1 // pred_fallthru
      _
    // Predicated region
    $region34: #{tpu_custom_call.1} parent=1 // pred_check
      _
    $region35: #{tpu_custom_call.1} parent=1 // pred_check_branch
      %1555 = sbr.rel (0) target = $region37
    $region36: #{tpu_custom_call.1} parent=1 // pred_region
      %1557 = vsyncadd [#allocation8], 0
      %s1559 = sshll.u32 [#allocation7], 4
      %s1560 = int_to_ptr.vmem [resolvable:$true] %s1559
      %s1561 = sshll.u32 %s7, 4
      %s1562 = int_to_ptr.hbm [resolvable:$true] %s1561
      %1564 = dma.vmem_to_hbm [thread:$0]  %s1560, 128, %s1562, [#allocation8]
    $region37: #{tpu_custom_call.1} parent=1 // pred_fallthru
      _
    // Predicated region
    $region38: #{tpu_custom_call.1} parent=1 // pred_check
      _
    $region39: #{tpu_custom_call.1} parent=1 // pred_check_branch
      %1566 = sbr.rel (0) target = $region41
    $region40: #{tpu_custom_call.1} parent=1 // pred_region
      %1568 = dma.done [#allocation5], 128
    $region41: #{tpu_custom_call.1} parent=1 // pred_fallthru
      _
    // Predicated region
    $region42: #{tpu_custom_call.1} parent=1 // pred_check
      _
    $region43: #{tpu_custom_call.1} parent=1 // pred_check_branch
      %1570 = sbr.rel (0) target = $region45
    $region44: #{tpu_custom_call.1} parent=1 // pred_region
      %1572 = dma.done [#allocation8], 128
    $region45: #{tpu_custom_call.1} parent=1 // pred_fallthru
      _
    %1573 = vsyncpa [#allocation4], 1
    %1574 = vsyncpa [#allocation5], 1
    %1575 = vsyncpa [#allocation8], 1

</llo_original>
